<compile_context>
chip_gen: v5e
topology: v5e:2x2
jax: 0.10.0
libtpu: 0.0.40
codegen_flags: <defaults>
</compile_context>

<pallas_src>
import functools

import jax
import jax.numpy as jnp
from jax.experimental import pallas as pl
from jax.experimental.pallas import tpu as pltpu

LANE = 128          # TPU lane width: feature / class dims padded to this
SUBLANE = 8
NUM_LAYERS = 3


def _round_up(x, m):
    return ((x + m - 1) // m) * m


def _pad2d(a, rows, cols, value=0.0):
    r, c = a.shape
    return jnp.pad(a, ((0, rows - r), (0, cols - c)), constant_values=value)


def _vmem_budget_bytes():
    """Generation-aware VMEM budget (~70% of per-core capacity)."""
    cap = 128 * 1024 * 1024
    try:
        info = pltpu.get_tpu_info()
        cap_attr = getattr(info, "vmem_capacity_bytes", None)
        if cap_attr:
            cap = int(cap_attr)
    except Exception:
        pass
    return int(0.70 * cap)


# ---------------------------------------------------------------------------
# Kernels
# ---------------------------------------------------------------------------
def gnn_fused_kernel(adj_ref, h_ref, w_ref, s_ref, t_ref,
                     pool_ref, wc_ref, bc_ref, out_ref):
    """Whole GNN forward, fully resident in VMEM (single grid step).

      adj_ref : [Np, Np]      bf16  D^-1/2 (A+I) D^-1/2
      h_ref   : [Np, Fp]      bf16  node features (padded to a uniform width)
      w_ref   : [L, Fp, Fp]   f32   stacked layer weights
      s_ref   : [L, 1, Fp]    f32   fused eval-BN scale (gamma / sqrt(var+eps))
      t_ref   : [L, 1, Fp]    f32   fused eval-BN shift with conv bias folded
      pool_ref: [Gp, Np]      bf16  row-normalized graph membership (mean pool)
      wc_ref  : [Fp, Cp]      f32   classifier weight
      bc_ref  : [1, Cp]       f32   classifier bias
      out_ref : [Gp, Cp]      f32   logits
    """
    adj = adj_ref[...]
    h = h_ref[...]
    for l in range(NUM_LAYERS):                      # static unroll (layer chain)
        agg = jnp.dot(adj, h, preferred_element_type=jnp.float32)
        z = jnp.dot(agg, w_ref[l], preferred_element_type=jnp.float32)
        # eval-BN (scale/shift) + ReLU in f32; dropout is identity in eval.
        h = jnp.maximum(z * s_ref[l] + t_ref[l], 0.0).astype(jnp.bfloat16)
    pooled = jnp.dot(pool_ref[...], h, preferred_element_type=jnp.float32)
    out_ref[...] = (jnp.dot(pooled, wc_ref[...],
                            preferred_element_type=jnp.float32) + bc_ref[...])


def gcn_layer_kernel(adj_ref, h_ref, w_ref, s_ref, t_ref, out_ref):
    """Fused GCN layer (conv + eval-BN + ReLU) for one row tile of nodes.

      adj_ref : [TM, Np]   bf16  row tile of the normalized adjacency (streamed)
      h_ref   : [Np, Fp]   bf16  node features (grid-invariant, resident)
      w_ref   : [Fp, Fp]   f32   layer weight
      s_ref   : [1, Fp]    f32   BN scale ; t_ref: BN shift (+conv bias)
      out_ref : [TM, Fp]   bf16
    """
    agg = jnp.dot(adj_ref[...], h_ref[...], preferred_element_type=jnp.float32)
    z = jnp.dot(agg, w_ref[...], preferred_element_type=jnp.float32)
    out_ref[...] = jnp.maximum(z * s_ref[...] + t_ref[...], 0.0).astype(out_ref.dtype)


def gcn_last_layer_pool_kernel(adj_ref, h_ref, w_ref, s_ref, t_ref,
                               pool_ref, wc_ref, bc_ref, out_ref, acc_ref):
    """Last GCN layer + global_mean_pool + classifier, fused.

    The row-tile axis is a reduction for the pooled output: each grid step
    accumulates pool[:, tile] @ h_tile into a (Gp, Fp) f32 scratch; the
    classifier is applied once at the last step.  Layer-3 activations never
    touch HBM.
    """
    i = pl.program_id(0)

    @pl.when(i == 0)
    def _init():
        acc_ref[...] = jnp.zeros_like(acc_ref)

    agg = jnp.dot(adj_ref[...], h_ref[...], preferred_element_type=jnp.float32)
    z = jnp.dot(agg, w_ref[...], preferred_element_type=jnp.float32)
    h_tile = jnp.maximum(z * s_ref[...] + t_ref[...], 0.0).astype(jnp.bfloat16)
    acc_ref[...] += jnp.dot(pool_ref[...], h_tile,
                            preferred_element_type=jnp.float32)

    @pl.when(i == pl.num_programs(0) - 1)
    def _finalize():
        out_ref[...] = (jnp.dot(acc_ref[...], wc_ref[...],
                                preferred_element_type=jnp.float32) + bc_ref[...])


# ---------------------------------------------------------------------------
# VMEM accounting / tile selection
# ---------------------------------------------------------------------------
def _fused_vmem_need(n_pad, f_p, g_pad, c_pad):
    inputs = (n_pad * n_pad * 2                 # adj (bf16)
              + n_pad * f_p * 2                 # h0 (bf16)
              + NUM_LAYERS * f_p * f_p * 4      # stacked weights (f32)
              + 2 * NUM_LAYERS * f_p * 4        # BN scale / shift (f32)
              + g_pad * n_pad * 2               # pool (bf16)
              + f_p * c_pad * 4 + c_pad * 4)    # classifier
    out = g_pad * c_pad * 4
    temps = 6 * n_pad * f_p * 4                 # agg / z / h temporaries
    return 2 * (inputs + out) + temps           # x2: default double buffering


def _choose_row_tile(n, f_p, g_pad, c_pad, budget):
    """Largest row tile (128..512) whose pipelined working set fits the per-chip
    VMEM budget, preferring >= 2 tiles so v7x's two TensorCores both get work.
    Every BlockSpec is accounted at its default 2x buffering."""
    candidates = (512, 256, 128)

    def need(tm, n_pad):
        b = 0
        b += 2 * tm * n_pad * 2                       # adj row tile (bf16)
        b += 2 * n_pad * f_p * 2                      # resident h (bf16)
        b += 2 * f_p * f_p * 4                        # W (f32)
        b += 2 * 2 * f_p * 4                          # BN scale / shift (f32)
        b += 2 * max(tm * f_p * 2, g_pad * tm * 2)    # layer-out / pool tile
        b += 2 * (f_p * c_pad + c_pad + g_pad * c_pad) * 4  # Wc, bc, logits
        b += g_pad * f_p * 4                          # pooled accumulator
        b += 4 * tm * f_p * 4                         # matmul temporaries (f32)
        return b

    fitting = []
    for tm in candidates:
        n_pad = _round_up(n, tm)
        if need(tm, n_pad) <= budget:
            fitting.append((tm, n_pad))
    if not fitting:
        # TODO(synk): graphs this large need adjacency column tiling /
        # block-sparse aggregation rather than a full dense row stream.
        tm = candidates[-1]
        return tm, _round_up(n, tm)
    for tm, n_pad in fitting:            # largest tile that still leaves >=2
        if n_pad // tm >= 2:             # tiles (v7x 2-core load balance)
            return tm, n_pad
    return fitting[-1]                   # tiny graph: single tile is fine


# ---------------------------------------------------------------------------
# Wrapper
# ---------------------------------------------------------------------------
@functools.partial(jax.jit, static_argnames=("force_tiled",))
def gnn_forward(x, adj_norm, params, pool_mat, force_tiled=False):
    (w0, b0, s0, t0, w1, b1, s1, t1, w2, b2, s2, t2, wc, bc) = params
    n, f_in = x.shape
    g = pool_mat.shape[0]
    c = wc.shape[1]
    f_hid = w0.shape[1]

    f_p = _round_up(max(f_in, f_hid), LANE)   # uniform padded feature width
    c_pad = _round_up(c, LANE)
    g_pad = _round_up(g, SUBLANE)
    budget = _vmem_budget_bytes()

    layer_params = ((w0, b0, s0, t0), (w1, b1, s1, t1), (w2, b2, s2, t2))
    # Pad all layers to a uniform (f_p, f_p); extra zero rows/cols are inert.
    # Conv bias is folded into the BN shift:  t' = b*s + t.
    w_stack = jnp.stack([_pad2d(w, f_p, f_p) for (w, _, _, _) in layer_params])
    s_stack = jnp.stack([_pad2d(s, 1, f_p, value=1.0) for (_, _, s, _) in layer_params])
    t_stack = jnp.stack([_pad2d(b * s + t, 1, f_p) for (_, b, s, t) in layer_params])
    wc_p = _pad2d(wc, f_p, c_pad)             # f32
    bc_p = _pad2d(bc, 1, c_pad)               # f32

    cp = lambda sem: pltpu.CompilerParams(dimension_semantics=sem,
                                          vmem_limit_bytes=budget)

    # ----------------------- PATH A: fully fused ---------------------------
    n_pad_f = _round_up(n, LANE)
    if (not force_tiled) and _fused_vmem_need(n_pad_f, f_p, g_pad, c_pad) <= budget:
        adj = _pad2d(adj_norm, n_pad_f, n_pad_f).astype(jnp.bfloat16)
        h0 = _pad2d(x, n_pad_f, f_p).astype(jnp.bfloat16)
        pool_p = _pad2d(pool_mat, g_pad, n_pad_f).astype(jnp.bfloat16)
        out_pad = pl.pallas_call(
            gnn_fused_kernel,
            out_shape=jax.ShapeDtypeStruct((g_pad, c_pad), jnp.float32),
            grid=(1,),
            in_specs=[
                pl.BlockSpec((n_pad_f, n_pad_f), lambda i: (0, 0)),
                pl.BlockSpec((n_pad_f, f_p), lambda i: (0, 0)),
                pl.BlockSpec((NUM_LAYERS, f_p, f_p), lambda i: (0, 0, 0)),
                pl.BlockSpec((NUM_LAYERS, 1, f_p), lambda i: (0, 0, 0)),
                pl.BlockSpec((NUM_LAYERS, 1, f_p), lambda i: (0, 0, 0)),
                pl.BlockSpec((g_pad, n_pad_f), lambda i: (0, 0)),
                pl.BlockSpec((f_p, c_pad), lambda i: (0, 0)),
                pl.BlockSpec((1, c_pad), lambda i: (0, 0)),
            ],
            out_specs=pl.BlockSpec((g_pad, c_pad), lambda i: (0, 0)),
            compiler_params=cp(("arbitrary",)),
        )(adj, h0, w_stack, s_stack, t_stack, pool_p, wc_p, bc_p)
        return out_pad[:g, :c]

    # ----------------------- PATH B: row-tiled stream ----------------------
    tm, n_pad = _choose_row_tile(n, f_p, g_pad, c_pad, budget)
    grid = (n_pad // tm,)
    adj = _pad2d(adj_norm, n_pad, n_pad).astype(jnp.bfloat16)
    h = _pad2d(x, n_pad, f_p).astype(jnp.bfloat16)
    pool_p = _pad2d(pool_mat, g_pad, n_pad).astype(jnp.bfloat16)

    # layers 0 .. L-2 : conv + BN + ReLU, h written back to HBM
    for l in range(NUM_LAYERS - 1):
        h = pl.pallas_call(
            gcn_layer_kernel,
            out_shape=jax.ShapeDtypeStruct((n_pad, f_p), jnp.bfloat16),
            grid=grid,
            in_specs=[
                pl.BlockSpec((tm, n_pad), lambda i: (i, 0)),   # adj: streamed
                pl.BlockSpec((n_pad, f_p), lambda i: (0, 0)),  # h: resident
                pl.BlockSpec((f_p, f_p), lambda i: (0, 0)),
                pl.BlockSpec((1, f_p), lambda i: (0, 0)),
                pl.BlockSpec((1, f_p), lambda i: (0, 0)),
            ],
            out_specs=pl.BlockSpec((tm, f_p), lambda i: (i, 0)),
            compiler_params=cp(("parallel",)),
        )(adj, h, w_stack[l], s_stack[l], t_stack[l])

    # last layer + mean pool + classifier, fused (row axis is a reduction)
    out_pad = pl.pallas_call(
        gcn_last_layer_pool_kernel,
        out_shape=jax.ShapeDtypeStruct((g_pad, c_pad), jnp.float32),
        grid=grid,
        in_specs=[
            pl.BlockSpec((tm, n_pad), lambda i: (i, 0)),
            pl.BlockSpec((n_pad, f_p), lambda i: (0, 0)),
            pl.BlockSpec((f_p, f_p), lambda i: (0, 0)),
            pl.BlockSpec((1, f_p), lambda i: (0, 0)),
            pl.BlockSpec((1, f_p), lambda i: (0, 0)),
            pl.BlockSpec((g_pad, tm), lambda i: (0, i)),       # pool: streamed cols
            pl.BlockSpec((f_p, c_pad), lambda i: (0, 0)),
            pl.BlockSpec((1, c_pad), lambda i: (0, 0)),
        ],
        out_specs=pl.BlockSpec((g_pad, c_pad), lambda i: (0, 0)),
        scratch_shapes=[pltpu.VMEM((g_pad, f_p), jnp.float32)],
        compiler_params=cp(("arbitrary",)),
    )(adj, h, w_stack[NUM_LAYERS - 1], s_stack[NUM_LAYERS - 1],
      t_stack[NUM_LAYERS - 1], pool_p, wc_p, bc_p)
    return out_pad[:g, :c]


# ---------------------------------------------------------------------------
# Graph / parameter construction (JAX glue)
# ---------------------------------------------------------------------------
def build_normalized_adjacency(edge_index, num_nodes):
    # A_hat = A + I ;  adj_norm = D^{-1/2} A_hat D^{-1/2}
    src, dst = edge_index
    adj = jnp.zeros((num_nodes, num_nodes), jnp.float32)
    adj = adj.at[dst, src].set(1.0)               # message src -> dst
    diag = jnp.arange(num_nodes)
    adj = adj.at[diag, diag].set(1.0)             # remaining self loops
    deg = adj.sum(axis=1)
    dinv = jnp.where(deg > 0, 1.0 / jnp.sqrt(deg), 0.0)
    return dinv[:, None] * adj * dinv[None, :]


def build_mean_pool_matrix(batch, num_graphs, num_nodes):
    onehot = (batch[None, :] == jnp.arange(num_graphs)[:, None]).astype(jnp.float32)
    counts = onehot.sum(axis=1, keepdims=True)
    return onehot / jnp.maximum(counts, 1.0)


def init_params(key, in_channels, hidden_channels, out_channels, num_layers=3):
    params = []
    dims = [in_channels] + [hidden_channels] * num_layers
    for i in range(num_layers):
        key, kw, kb, kg, kbeta = jax.random.split(key, 5)
        f_in, f_out = dims[i], dims[i + 1]
        w = jax.random.normal(kw, (f_in, f_out), jnp.float32) / jnp.sqrt(f_in)
        b = 0.01 * jax.random.normal(kb, (1, f_out), jnp.float32)
        # BatchNorm1d (eval): running_mean=0, running_var=1, eps=1e-5
        gamma = 1.0 + 0.1 * jax.random.normal(kg, (1, f_out), jnp.float32)
        beta = 0.1 * jax.random.normal(kbeta, (1, f_out), jnp.float32)
        running_mean = jnp.zeros((1, f_out), jnp.float32)
        running_var = jnp.ones((1, f_out), jnp.float32)
        scale = gamma / jnp.sqrt(running_var + 1e-5)
        shift = beta - running_mean * scale
        params += [w, b, scale, shift]
    key, kwc, kbc = jax.random.split(key, 3)
    wc = jax.random.normal(kwc, (hidden_channels, out_channels), jnp.float32) / jnp.sqrt(hidden_channels)
    bc = 0.01 * jax.random.normal(kbc, (1, out_channels), jnp.float32)
    params += [wc, bc]
    return tuple(params)


# ---------------------------------------------------------------------------
# References
# ---------------------------------------------------------------------------
def reference_forward(x, adj_norm, params, pool_mat):
    """Pure-f32 reference (exact module math, eval mode)."""
    (w0, b0, s0, t0, w1, b1, s1, t1, w2, b2, s2, t2, wc, bc) = params
    h = x
    for w, b, s, t in ((w0, b0, s0, t0), (w1, b1, s1, t1), (w2, b2, s2, t2)):
        h = jnp.maximum((adj_norm @ (h @ w) + b) * s + t, 0.0)
    return (pool_mat @ h) @ wc + bc


def reference_forward_matched(x, adj_norm, params, pool_mat):
    """Pure-JAX reference mirroring the kernels' mixed precision (bf16 adj / h /
    pool, f32 accumulation, f32 weights / BN / classifier)."""
    (w0, b0, s0, t0, w1, b1, s1, t1, w2, b2, s2, t2, wc, bc) = params
    bf = jnp.bfloat16
    adj = adj_norm.astype(bf)
    h = x.astype(bf)
    for w, b, s, t in ((w0, b0, s0, t0), (w1, b1, s1, t1), (w2, b2, s2, t2)):
        agg = jnp.dot(adj, h, preferred_element_type=jnp.float32)
        z = jnp.dot(agg, w, preferred_element_type=jnp.float32)
        h = jnp.maximum(z * s + (b * s + t), 0.0).astype(bf)
    pooled = jnp.dot(pool_mat.astype(bf), h, preferred_element_type=jnp.float32)
    return jnp.dot(pooled, wc, preferred_element_type=jnp.float32) + bc


if __name__ == "__main__":
    key = jax.random.PRNGKey(0)

    nodes_per_graph = 64
    num_graphs = 4
    num_nodes = num_graphs * nodes_per_graph      # 256 nodes total
    in_channels = 8
    hidden_channels = 32
    out_channels = 4

    key, kx = jax.random.split(key)
    x = jax.random.normal(kx, (num_nodes, in_channels), jnp.float32)

    # ring graphs (undirected -> both directions)
    edges = []
    for gi in range(num_graphs):
        base = gi * nodes_per_graph
        for i in range(nodes_per_graph):
            a, b = base + i, base + (i + 1) % nodes_per_graph
            edges.append((a, b))
            edges.append((b, a))
    edge_index = jnp.array(edges, jnp.int32).T                       # [2, E]
    batch = jnp.repeat(jnp.arange(num_graphs, dtype=jnp.int32), nodes_per_graph)

    adj_norm = build_normalized_adjacency(edge_index, num_nodes)
    pool_mat = build_mean_pool_matrix(batch, num_graphs, num_nodes)
    params = init_params(key, in_channels, hidden_channels, out_channels)

    ref_matched = reference_forward_matched(x, adj_norm, params, pool_mat)
    ref_f32 = reference_forward(x, adj_norm, params, pool_mat)

    # PATH A: fully fused single kernel (taken automatically at this size)
    out = jax.block_until_ready(gnn_forward(x, adj_norm, params, pool_mat))
    assert out.shape == (num_graphs, out_channels)
    assert jnp.allclose(out, ref_matched, atol=1e-2, rtol=1e-2), \
        "fused path mismatch vs precision-matched reference"
    rel_err = jnp.max(jnp.abs(out - ref_f32)) / (jnp.max(jnp.abs(ref_f32)) + 1e-6)
    assert rel_err < 0.15, f"fused path deviates from f32 reference (rel {rel_err})"

    # PATH B: row-tiled fallback (exercised explicitly so it stays correct)
    out_t = jax.block_until_ready(
        gnn_forward(x, adj_norm, params, pool_mat, force_tiled=True))
    assert out_t.shape == (num_graphs, out_channels)
    assert jnp.allclose(out_t, ref_matched, atol=1e-2, rtol=1e-2), \
        "tiled path mismatch vs precision-matched reference"
    assert jnp.allclose(out_t, out, atol=1e-2, rtol=1e-2), \
        "fused vs tiled path mismatch"

    print("KERNEL_OK")
</pallas_src>

<mosaic_0001>
module attributes {stable_mosaic.version = 11 : i64} {
  func.func @gnn_fused_kernel(%arg0: i32, %arg1: memref<256x256xbf16, #tpu.memory_space<vmem>>, %arg2: memref<256x128xbf16, #tpu.memory_space<vmem>>, %arg3: memref<3x128x128xf32, #tpu.memory_space<vmem>>, %arg4: memref<3x1x128xf32, #tpu.memory_space<vmem>>, %arg5: memref<3x1x128xf32, #tpu.memory_space<vmem>>, %arg6: memref<8x256xbf16, #tpu.memory_space<vmem>>, %arg7: memref<128x128xf32, #tpu.memory_space<vmem>>, %arg8: memref<1x128xf32, #tpu.memory_space<vmem>>, %arg9: memref<8x128xf32, #tpu.memory_space<vmem>>) attributes {dimension_semantics = [#tpu.dimension_semantics<arbitrary>], iteration_bounds = array<i64: 1>, scalar_prefetch = 0 : i64, scratch_operands = 0 : i64, tpu.core_type = #tpu.core_type<tc>, window_params = [{pipeline_mode = #tpu.pipeline_mode<synchronous>, transform_indices = @transform_0, window_bounds = array<i64: 256, 256>}, {pipeline_mode = #tpu.pipeline_mode<synchronous>, transform_indices = @transform_1, window_bounds = array<i64: 256, 128>}, {pipeline_mode = #tpu.pipeline_mode<synchronous>, transform_indices = @transform_2, window_bounds = array<i64: 3, 128, 128>}, {pipeline_mode = #tpu.pipeline_mode<synchronous>, transform_indices = @transform_3, window_bounds = array<i64: 3, 1, 128>}, {pipeline_mode = #tpu.pipeline_mode<synchronous>, transform_indices = @transform_4, window_bounds = array<i64: 3, 1, 128>}, {pipeline_mode = #tpu.pipeline_mode<synchronous>, transform_indices = @transform_5, window_bounds = array<i64: 8, 256>}, {pipeline_mode = #tpu.pipeline_mode<synchronous>, transform_indices = @transform_6, window_bounds = array<i64: 128, 128>}, {pipeline_mode = #tpu.pipeline_mode<synchronous>, transform_indices = @transform_7, window_bounds = array<i64: 1, 128>}, {pipeline_mode = #tpu.pipeline_mode<synchronous>, transform_indices = @transform_8, window_bounds = array<i64: 8, 128>}]} {
    %c0 = arith.constant 0 : index
    %c0_0 = arith.constant 0 : index
    %0 = vector.load %arg1[%c0, %c0_0] : memref<256x256xbf16, #tpu.memory_space<vmem>>, vector<256x256xbf16>
    %c0_1 = arith.constant 0 : index
    %c0_2 = arith.constant 0 : index
    %1 = vector.load %arg2[%c0_1, %c0_2] : memref<256x128xbf16, #tpu.memory_space<vmem>>, vector<256x128xbf16>
    %cst = arith.constant dense<0.000000e+00> : vector<256x128xf32>
    %2 = tpu.matmul %0, %1, %cst {dimension_numbers = #tpu.dot_dimension_numbers<[1], [0], [0], [1], [0, 0, 1, 1], [], []>} : vector<256x256xbf16>, vector<256x128xbf16>, vector<256x128xf32> -> vector<256x128xf32>
    %c0_3 = arith.constant 0 : index
    %c0_4 = arith.constant 0 : index
    %c0_5 = arith.constant 0 : index
    %3 = vector.load %arg3[%c0_3, %c0_4, %c0_5] : memref<3x128x128xf32, #tpu.memory_space<vmem>>, vector<1x128x128xf32>
    %4 = vector.shape_cast %3 : vector<1x128x128xf32> to vector<128x128xf32>
    %cst_6 = arith.constant dense<0.000000e+00> : vector<256x128xf32>
    %5 = tpu.matmul %2, %4, %cst_6 {dimension_numbers = #tpu.dot_dimension_numbers<[1], [0], [0], [1], [0, 0, 1, 1], [], []>} : vector<256x128xf32>, vector<128x128xf32>, vector<256x128xf32> -> vector<256x128xf32>
    %c0_7 = arith.constant 0 : index
    %c0_8 = arith.constant 0 : index
    %c0_9 = arith.constant 0 : index
    %6 = vector.load %arg4[%c0_7, %c0_8, %c0_9] : memref<3x1x128xf32, #tpu.memory_space<vmem>>, vector<1x1x128xf32>
    %7 = vector.shape_cast %6 : vector<1x1x128xf32> to vector<1x128xf32>
    %8 = vector.broadcast %7 : vector<1x128xf32> to vector<256x128xf32>
    %9 = arith.mulf %5, %8 : vector<256x128xf32>
    %c0_10 = arith.constant 0 : index
    %c0_11 = arith.constant 0 : index
    %c0_12 = arith.constant 0 : index
    %10 = vector.load %arg5[%c0_10, %c0_11, %c0_12] : memref<3x1x128xf32, #tpu.memory_space<vmem>>, vector<1x1x128xf32>
    %11 = vector.shape_cast %10 : vector<1x1x128xf32> to vector<1x128xf32>
    %12 = vector.broadcast %11 : vector<1x128xf32> to vector<256x128xf32>
    %13 = arith.addf %9, %12 : vector<256x128xf32>
    %cst_13 = arith.constant 0.000000e+00 : f32
    %14 = vector.broadcast %cst_13 : f32 to vector<256x128xf32>
    %15 = arith.maximumf %13, %14 : vector<256x128xf32>
    %16 = arith.truncf %15 : vector<256x128xf32> to vector<256x128xbf16>
    %cst_14 = arith.constant dense<0.000000e+00> : vector<256x128xf32>
    %17 = tpu.matmul %0, %16, %cst_14 {dimension_numbers = #tpu.dot_dimension_numbers<[1], [0], [0], [1], [0, 0, 1, 1], [], []>} : vector<256x256xbf16>, vector<256x128xbf16>, vector<256x128xf32> -> vector<256x128xf32>
    %c1 = arith.constant 1 : index
    %c0_15 = arith.constant 0 : index
    %c0_16 = arith.constant 0 : index
    %18 = vector.load %arg3[%c1, %c0_15, %c0_16] : memref<3x128x128xf32, #tpu.memory_space<vmem>>, vector<1x128x128xf32>
    %19 = vector.shape_cast %18 : vector<1x128x128xf32> to vector<128x128xf32>
    %cst_17 = arith.constant dense<0.000000e+00> : vector<256x128xf32>
    %20 = tpu.matmul %17, %19, %cst_17 {dimension_numbers = #tpu.dot_dimension_numbers<[1], [0], [0], [1], [0, 0, 1, 1], [], []>} : vector<256x128xf32>, vector<128x128xf32>, vector<256x128xf32> -> vector<256x128xf32>
    %c1_18 = arith.constant 1 : index
    %c0_19 = arith.constant 0 : index
    %c0_20 = arith.constant 0 : index
    %21 = vector.load %arg4[%c1_18, %c0_19, %c0_20] : memref<3x1x128xf32, #tpu.memory_space<vmem>>, vector<1x1x128xf32>
    %22 = vector.shape_cast %21 : vector<1x1x128xf32> to vector<1x128xf32>
    %23 = vector.broadcast %22 : vector<1x128xf32> to vector<256x128xf32>
    %24 = arith.mulf %20, %23 : vector<256x128xf32>
    %c1_21 = arith.constant 1 : index
    %c0_22 = arith.constant 0 : index
    %c0_23 = arith.constant 0 : index
    %25 = vector.load %arg5[%c1_21, %c0_22, %c0_23] : memref<3x1x128xf32, #tpu.memory_space<vmem>>, vector<1x1x128xf32>
    %26 = vector.shape_cast %25 : vector<1x1x128xf32> to vector<1x128xf32>
    %27 = vector.broadcast %26 : vector<1x128xf32> to vector<256x128xf32>
    %28 = arith.addf %24, %27 : vector<256x128xf32>
    %cst_24 = arith.constant 0.000000e+00 : f32
    %29 = vector.broadcast %cst_24 : f32 to vector<256x128xf32>
    %30 = arith.maximumf %28, %29 : vector<256x128xf32>
    %31 = arith.truncf %30 : vector<256x128xf32> to vector<256x128xbf16>
    %cst_25 = arith.constant dense<0.000000e+00> : vector<256x128xf32>
    %32 = tpu.matmul %0, %31, %cst_25 {dimension_numbers = #tpu.dot_dimension_numbers<[1], [0], [0], [1], [0, 0, 1, 1], [], []>} : vector<256x256xbf16>, vector<256x128xbf16>, vector<256x128xf32> -> vector<256x128xf32>
    %c2 = arith.constant 2 : index
    %c0_26 = arith.constant 0 : index
    %c0_27 = arith.constant 0 : index
    %33 = vector.load %arg3[%c2, %c0_26, %c0_27] : memref<3x128x128xf32, #tpu.memory_space<vmem>>, vector<1x128x128xf32>
    %34 = vector.shape_cast %33 : vector<1x128x128xf32> to vector<128x128xf32>
    %cst_28 = arith.constant dense<0.000000e+00> : vector<256x128xf32>
    %35 = tpu.matmul %32, %34, %cst_28 {dimension_numbers = #tpu.dot_dimension_numbers<[1], [0], [0], [1], [0, 0, 1, 1], [], []>} : vector<256x128xf32>, vector<128x128xf32>, vector<256x128xf32> -> vector<256x128xf32>
    %c2_29 = arith.constant 2 : index
    %c0_30 = arith.constant 0 : index
    %c0_31 = arith.constant 0 : index
    %36 = vector.load %arg4[%c2_29, %c0_30, %c0_31] : memref<3x1x128xf32, #tpu.memory_space<vmem>>, vector<1x1x128xf32>
    %37 = vector.shape_cast %36 : vector<1x1x128xf32> to vector<1x128xf32>
    %38 = vector.broadcast %37 : vector<1x128xf32> to vector<256x128xf32>
    %39 = arith.mulf %35, %38 : vector<256x128xf32>
    %c2_32 = arith.constant 2 : index
    %c0_33 = arith.constant 0 : index
    %c0_34 = arith.constant 0 : index
    %40 = vector.load %arg5[%c2_32, %c0_33, %c0_34] : memref<3x1x128xf32, #tpu.memory_space<vmem>>, vector<1x1x128xf32>
    %41 = vector.shape_cast %40 : vector<1x1x128xf32> to vector<1x128xf32>
    %42 = vector.broadcast %41 : vector<1x128xf32> to vector<256x128xf32>
    %43 = arith.addf %39, %42 : vector<256x128xf32>
    %cst_35 = arith.constant 0.000000e+00 : f32
    %44 = vector.broadcast %cst_35 : f32 to vector<256x128xf32>
    %45 = arith.maximumf %43, %44 : vector<256x128xf32>
    %46 = arith.truncf %45 : vector<256x128xf32> to vector<256x128xbf16>
    %c0_36 = arith.constant 0 : index
    %c0_37 = arith.constant 0 : index
    %47 = vector.load %arg6[%c0_36, %c0_37] : memref<8x256xbf16, #tpu.memory_space<vmem>>, vector<8x256xbf16>
    %cst_38 = arith.constant dense<0.000000e+00> : vector<8x128xf32>
    %48 = tpu.matmul %47, %46, %cst_38 {dimension_numbers = #tpu.dot_dimension_numbers<[1], [0], [0], [1], [0, 0, 1, 1], [], []>} : vector<8x256xbf16>, vector<256x128xbf16>, vector<8x128xf32> -> vector<8x128xf32>
    %c0_39 = arith.constant 0 : index
    %c0_40 = arith.constant 0 : index
    %49 = vector.load %arg7[%c0_39, %c0_40] : memref<128x128xf32, #tpu.memory_space<vmem>>, vector<128x128xf32>
    %cst_41 = arith.constant dense<0.000000e+00> : vector<8x128xf32>
    %50 = tpu.matmul %48, %49, %cst_41 {dimension_numbers = #tpu.dot_dimension_numbers<[1], [0], [0], [1], [0, 0, 1, 1], [], []>} : vector<8x128xf32>, vector<128x128xf32>, vector<8x128xf32> -> vector<8x128xf32>
    %c0_42 = arith.constant 0 : index
    %c0_43 = arith.constant 0 : index
    %51 = vector.load %arg8[%c0_42, %c0_43] : memref<1x128xf32, #tpu.memory_space<vmem>>, vector<1x128xf32>
    %52 = vector.broadcast %51 : vector<1x128xf32> to vector<8x128xf32>
    %53 = arith.addf %50, %52 : vector<8x128xf32>
    %c0_44 = arith.constant 0 : index
    %c0_45 = arith.constant 0 : index
    %54 = vector.load %arg9[%c0_44, %c0_45] : memref<8x128xf32, #tpu.memory_space<vmem>>, vector<8x128xf32>
    tpu.vector_store %arg9[%c0_44, %c0_45], %53 {strides = array<i32>} : memref<8x128xf32, #tpu.memory_space<vmem>>, vector<8x128xf32>,
    return
  }
  func.func @transform_0(%arg0: i32) -> (i32, i32) {
    %c0_i32 = arith.constant 0 : i32
    %c0_i32_0 = arith.constant 0 : i32
    %c0_i32_1 = arith.constant 0 : i32
    return %c0_i32, %c0_i32_0 : i32, i32
  }
  func.func @transform_1(%arg0: i32) -> (i32, i32) {
    %c0_i32 = arith.constant 0 : i32
    %c0_i32_0 = arith.constant 0 : i32
    %c0_i32_1 = arith.constant 0 : i32
    return %c0_i32, %c0_i32_0 : i32, i32
  }
  func.func @transform_2(%arg0: i32) -> (i32, i32, i32) {
    %c0_i32 = arith.constant 0 : i32
    %c0_i32_0 = arith.constant 0 : i32
    %c0_i32_1 = arith.constant 0 : i32
    %c0_i32_2 = arith.constant 0 : i32
    return %c0_i32, %c0_i32_0, %c0_i32_1 : i32, i32, i32
  }
  func.func @transform_3(%arg0: i32) -> (i32, i32, i32) {
    %c0_i32 = arith.constant 0 : i32
    %c0_i32_0 = arith.constant 0 : i32
    %c0_i32_1 = arith.constant 0 : i32
    %c0_i32_2 = arith.constant 0 : i32
    return %c0_i32, %c0_i32_0, %c0_i32_1 : i32, i32, i32
  }
  func.func @transform_4(%arg0: i32) -> (i32, i32, i32) {
    %c0_i32 = arith.constant 0 : i32
    %c0_i32_0 = arith.constant 0 : i32
    %c0_i32_1 = arith.constant 0 : i32
    %c0_i32_2 = arith.constant 0 : i32
    return %c0_i32, %c0_i32_0, %c0_i32_1 : i32, i32, i32
  }
  func.func @transform_5(%arg0: i32) -> (i32, i32) {
    %c0_i32 = arith.constant 0 : i32
    %c0_i32_0 = arith.constant 0 : i32
    %c0_i32_1 = arith.constant 0 : i32
    return %c0_i32, %c0_i32_0 : i32, i32
  }
  func.func @transform_6(%arg0: i32) -> (i32, i32) {
    %c0_i32 = arith.constant 0 : i32
    %c0_i32_0 = arith.constant 0 : i32
    %c0_i32_1 = arith.constant 0 : i32
    return %c0_i32, %c0_i32_0 : i32, i32
  }
  func.func @transform_7(%arg0: i32) -> (i32, i32) {
    %c0_i32 = arith.constant 0 : i32
    %c0_i32_0 = arith.constant 0 : i32
    %c0_i32_1 = arith.constant 0 : i32
    return %c0_i32, %c0_i32_0 : i32, i32
  }
  func.func @transform_8(%arg0: i32) -> (i32, i32) {
    %c0_i32 = arith.constant 0 : i32
    %c0_i32_0 = arith.constant 0 : i32
    %c0_i32_1 = arith.constant 0 : i32
    return %c0_i32, %c0_i32_0 : i32, i32
  }
}

</mosaic_0001>

<llo_original>
// kernel: gnn_forward.1
$region0: #{gnn_forward.1}
  #allocation0 [shape = 'u32[]', space=smem, size = 0x4, offset = 0x4, fixed_abs, tag = 'smem constant byte address 0x4 - core index']
  #allocation1 [shape = 'u32[72,128]{1,0:T(1,128)}', space=vmem, size = 0x9000, scoped, tag = 'internal scratch']
  %s0 = inlined_call_operand.vmem [shape: bf16[256,256], index: 0, kind: input, shape index: {}]
  %s1 = inlined_call_operand.vmem [shape: bf16[256,128], index: 1, kind: input, shape index: {}]
  %s2 = inlined_call_operand.vmem [shape: f32[3,128,128], index: 2, kind: input, shape index: {}]
  %s3 = inlined_call_operand.vmem [shape: f32[3,1,128], index: 3, kind: input, shape index: {}]
  %s4 = inlined_call_operand.vmem [shape: f32[3,1,128], index: 4, kind: input, shape index: {}]
  %s5 = inlined_call_operand.vmem [shape: bf16[8,256], index: 5, kind: input, shape index: {}]
  %s6 = inlined_call_operand.vmem [shape: f32[128,128], index: 6, kind: input, shape index: {}]
  %s7 = inlined_call_operand.vmem [shape: f32[1,128], index: 7, kind: input, shape index: {}]
  %s8 = inlined_call_operand.vmem [shape: f32[8,128], index: 8, kind: output, shape index: {}]
  %s9 = sld [smem:[#allocation0]]
  $region42: #{gnn_forward.1} parent=0
    _
  %s11 = ssub.s32 1, %s9
  %s12 = scalar_select 0, %s11, %s9
  // Predicated region
  $region2: #{gnn_forward.1} parent=0 // pred_check
    _
  $region3: #{gnn_forward.1} parent=0 // pred_check_branch
    %14 = sbr.rel (0) target = $region5
  $region4: #{gnn_forward.1} parent=0 // pred_region
    _
  $region5: #{gnn_forward.1} parent=0 // pred_fallthru
    _
  // Predicated region
  $region6: #{gnn_forward.1} parent=0 // pred_check
    _
  $region7: #{gnn_forward.1} parent=0 // pred_check_branch
    %16 = sbr.rel (0) target = $region9
  $region8: #{gnn_forward.1} parent=0 // pred_region
    _
  $region9: #{gnn_forward.1} parent=0 // pred_fallthru
    _
  // Predicated region
  $region10: #{gnn_forward.1} parent=0 // pred_check
    _
  $region11: #{gnn_forward.1} parent=0 // pred_check_branch
    %18 = sbr.rel (0) target = $region13
  $region12: #{gnn_forward.1} parent=0 // pred_region
    _
  $region13: #{gnn_forward.1} parent=0 // pred_fallthru
    _
  // Predicated region
  $region14: #{gnn_forward.1} parent=0 // pred_check
    _
  $region15: #{gnn_forward.1} parent=0 // pred_check_branch
    %20 = sbr.rel (0) target = $region17
  $region16: #{gnn_forward.1} parent=0 // pred_region
    _
  $region17: #{gnn_forward.1} parent=0 // pred_fallthru
    _
  // Predicated region
  $region18: #{gnn_forward.1} parent=0 // pred_check
    _
  $region19: #{gnn_forward.1} parent=0 // pred_check_branch
    %22 = sbr.rel (0) target = $region21
  $region20: #{gnn_forward.1} parent=0 // pred_region
    _
  $region21: #{gnn_forward.1} parent=0 // pred_fallthru
    _
  // Predicated region
  $region22: #{gnn_forward.1} parent=0 // pred_check
    _
  $region23: #{gnn_forward.1} parent=0 // pred_check_branch
    %24 = sbr.rel (0) target = $region25
  $region24: #{gnn_forward.1} parent=0 // pred_region
    _
  $region25: #{gnn_forward.1} parent=0 // pred_fallthru
    _
  // Predicated region
  $region26: #{gnn_forward.1} parent=0 // pred_check
    _
  $region27: #{gnn_forward.1} parent=0 // pred_check_branch
    %26 = sbr.rel (0) target = $region29
  $region28: #{gnn_forward.1} parent=0 // pred_region
    _
  $region29: #{gnn_forward.1} parent=0 // pred_fallthru
    _
  // Predicated region
  $region30: #{gnn_forward.1} parent=0 // pred_check
    _
  $region31: #{gnn_forward.1} parent=0 // pred_check_branch
    %28 = sbr.rel (0) target = $region33
  $region32: #{gnn_forward.1} parent=0 // pred_region
    _
  $region33: #{gnn_forward.1} parent=0 // pred_fallthru
    _
  %v29 = vld [vmem:[%s0] sm:$0xff]
  %v30 = vld [vmem:[%s0 + $0x8] sm:$0xff]
  %v31 = vld [vmem:[%s0 + $0x10] sm:$0xff]
  %v32 = vld [vmem:[%s0 + $0x18] sm:$0xff]
  %v33 = vld [vmem:[%s0 + $0x20] sm:$0xff]
  %v34 = vld [vmem:[%s0 + $0x28] sm:$0xff]
  %v35 = vld [vmem:[%s0 + $0x30] sm:$0xff]
  %v36 = vld [vmem:[%s0 + $0x38] sm:$0xff]
  %v37 = vld [vmem:[%s0 + $0x40] sm:$0xff]
  %v38 = vld [vmem:[%s0 + $0x48] sm:$0xff]
  %v39 = vld [vmem:[%s0 + $0x50] sm:$0xff]
  %v40 = vld [vmem:[%s0 + $0x58] sm:$0xff]
  %v41 = vld [vmem:[%s0 + $0x60] sm:$0xff]
  %v42 = vld [vmem:[%s0 + $0x68] sm:$0xff]
  %v43 = vld [vmem:[%s0 + $0x70] sm:$0xff]
  %v44 = vld [vmem:[%s0 + $0x78] sm:$0xff]
  %v45 = vld [vmem:[%s0 + $0x80] sm:$0xff]
  %v46 = vld [vmem:[%s0 + $0x88] sm:$0xff]
  %v47 = vld [vmem:[%s0 + $0x90] sm:$0xff]
  %v48 = vld [vmem:[%s0 + $0x98] sm:$0xff]
  %v49 = vld [vmem:[%s0 + $0xa0] sm:$0xff]
  %v50 = vld [vmem:[%s0 + $0xa8] sm:$0xff]
  %v51 = vld [vmem:[%s0 + $0xb0] sm:$0xff]
  %v52 = vld [vmem:[%s0 + $0xb8] sm:$0xff]
  %v53 = vld [vmem:[%s0 + $0xc0] sm:$0xff]
  %v54 = vld [vmem:[%s0 + $0xc8] sm:$0xff]
  %v55 = vld [vmem:[%s0 + $0xd0] sm:$0xff]
  %v56 = vld [vmem:[%s0 + $0xd8] sm:$0xff]
  %v57 = vld [vmem:[%s0 + $0xe0] sm:$0xff]
  %v58 = vld [vmem:[%s0 + $0xe8] sm:$0xff]
  %v59 = vld [vmem:[%s0 + $0xf0] sm:$0xff]
  %v60 = vld [vmem:[%s0 + $0xf8] sm:$0xff]
  %v61 = vld [vmem:[%s1] sm:$0xf]
  %v62 = vld [vmem:[%s1 + $0x4] sm:$0xf]
  %v63 = vld [vmem:[%s1 + $0x8] sm:$0xf]
  %v64 = vld [vmem:[%s1 + $0xc] sm:$0xf]
  %v65 = vld [vmem:[%s1 + $0x10] sm:$0xf]
  %v66 = vld [vmem:[%s1 + $0x14] sm:$0xf]
  %v67 = vld [vmem:[%s1 + $0x18] sm:$0xf]
  %v68 = vld [vmem:[%s1 + $0x1c] sm:$0xf]
  %v69 = vld [vmem:[%s1 + $0x20] sm:$0xf]
  %v70 = vld [vmem:[%s1 + $0x24] sm:$0xf]
  %v71 = vld [vmem:[%s1 + $0x28] sm:$0xf]
  %v72 = vld [vmem:[%s1 + $0x2c] sm:$0xf]
  %v73 = vld [vmem:[%s1 + $0x30] sm:$0xf]
  %v74 = vld [vmem:[%s1 + $0x34] sm:$0xf]
  %v75 = vld [vmem:[%s1 + $0x38] sm:$0xf]
  %v76 = vld [vmem:[%s1 + $0x3c] sm:$0xf]
  %v77 = vld [vmem:[%s1 + $0x40] sm:$0xf]
  %v78 = vld [vmem:[%s1 + $0x44] sm:$0xf]
  %v79 = vld [vmem:[%s1 + $0x48] sm:$0xf]
  %v80 = vld [vmem:[%s1 + $0x4c] sm:$0xf]
  %v81 = vld [vmem:[%s1 + $0x50] sm:$0xf]
  %v82 = vld [vmem:[%s1 + $0x54] sm:$0xf]
  %v83 = vld [vmem:[%s1 + $0x58] sm:$0xf]
  %v84 = vld [vmem:[%s1 + $0x5c] sm:$0xf]
  %v85 = vld [vmem:[%s1 + $0x60] sm:$0xf]
  %v86 = vld [vmem:[%s1 + $0x64] sm:$0xf]
  %v87 = vld [vmem:[%s1 + $0x68] sm:$0xf]
  %v88 = vld [vmem:[%s1 + $0x6c] sm:$0xf]
  %v89 = vld [vmem:[%s1 + $0x70] sm:$0xf]
  %v90 = vld [vmem:[%s1 + $0x74] sm:$0xf]
  %v91 = vld [vmem:[%s1 + $0x78] sm:$0xf]
  %v92 = vld [vmem:[%s1 + $0x7c] sm:$0xf]
  %v125 = vunpack.c.l.b16 %v29
  %v126 = vunpack.c.h.b16 %v29
  %v127 = vunpack.c.l.b16 %v30
  %v128 = vunpack.c.h.b16 %v30
  %v129 = vunpack.c.l.b16 %v31
  %v130 = vunpack.c.h.b16 %v31
  %v131 = vunpack.c.l.b16 %v32
  %v132 = vunpack.c.h.b16 %v32
  %v133 = vunpack.c.l.b16 %v33
  %v134 = vunpack.c.h.b16 %v33
  %v135 = vunpack.c.l.b16 %v34
  %v136 = vunpack.c.h.b16 %v34
  %v137 = vunpack.c.l.b16 %v35
  %v138 = vunpack.c.h.b16 %v35
  %v139 = vunpack.c.l.b16 %v36
  %v140 = vunpack.c.h.b16 %v36
  %v141 = vunpack.c.l.b16 %v37
  %v142 = vunpack.c.h.b16 %v37
  %v143 = vunpack.c.l.b16 %v38
  %v144 = vunpack.c.h.b16 %v38
  %v145 = vunpack.c.l.b16 %v39
  %v146 = vunpack.c.h.b16 %v39
  %v147 = vunpack.c.l.b16 %v40
  %v148 = vunpack.c.h.b16 %v40
  %v149 = vunpack.c.l.b16 %v41
  %v150 = vunpack.c.h.b16 %v41
  %v151 = vunpack.c.l.b16 %v42
  %v152 = vunpack.c.h.b16 %v42
  %v153 = vunpack.c.l.b16 %v43
  %v154 = vunpack.c.h.b16 %v43
  %v155 = vunpack.c.l.b16 %v44
  %v156 = vunpack.c.h.b16 %v44
  %v157 = vunpack.c.l.b16 %v45
  %v158 = vunpack.c.h.b16 %v45
  %v159 = vunpack.c.l.b16 %v46
  %v160 = vunpack.c.h.b16 %v46
  %v161 = vunpack.c.l.b16 %v47
  %v162 = vunpack.c.h.b16 %v47
  %v163 = vunpack.c.l.b16 %v48
  %v164 = vunpack.c.h.b16 %v48
  %v165 = vunpack.c.l.b16 %v49
  %v166 = vunpack.c.h.b16 %v49
  %v167 = vunpack.c.l.b16 %v50
  %v168 = vunpack.c.h.b16 %v50
  %v169 = vunpack.c.l.b16 %v51
  %v170 = vunpack.c.h.b16 %v51
  %v171 = vunpack.c.l.b16 %v52
  %v172 = vunpack.c.h.b16 %v52
  %v173 = vunpack.c.l.b16 %v53
  %v174 = vunpack.c.h.b16 %v53
  %v175 = vunpack.c.l.b16 %v54
  %v176 = vunpack.c.h.b16 %v54
  %v177 = vunpack.c.l.b16 %v55
  %v178 = vunpack.c.h.b16 %v55
  %v179 = vunpack.c.l.b16 %v56
  %v180 = vunpack.c.h.b16 %v56
  %v181 = vunpack.c.l.b16 %v57
  %v182 = vunpack.c.h.b16 %v57
  %v183 = vunpack.c.l.b16 %v58
  %v184 = vunpack.c.h.b16 %v58
  %v185 = vunpack.c.l.b16 %v59
  %v186 = vunpack.c.h.b16 %v59
  %v187 = vunpack.c.l.b16 %v60
  %v188 = vunpack.c.h.b16 %v60
  %v189 = vpack.c.b16 %v127, %v125
  %v190 = vpack.c.b16 %v128, %v126
  %v191 = vpack.c.b16 %v131, %v129
  %v192 = vpack.c.b16 %v132, %v130
  %v193 = vpack.c.b16 %v135, %v133
  %v194 = vpack.c.b16 %v136, %v134
  %v195 = vpack.c.b16 %v139, %v137
  %v196 = vpack.c.b16 %v140, %v138
  %v197 = vpack.c.b16 %v143, %v141
  %v198 = vpack.c.b16 %v144, %v142
  %v199 = vpack.c.b16 %v147, %v145
  %v200 = vpack.c.b16 %v148, %v146
  %v201 = vpack.c.b16 %v151, %v149
  %v202 = vpack.c.b16 %v152, %v150
  %v203 = vpack.c.b16 %v155, %v153
  %v204 = vpack.c.b16 %v156, %v154
  %v205 = vpack.c.b16 %v159, %v157
  %v206 = vpack.c.b16 %v160, %v158
  %v207 = vpack.c.b16 %v163, %v161
  %v208 = vpack.c.b16 %v164, %v162
  %v209 = vpack.c.b16 %v167, %v165
  %v210 = vpack.c.b16 %v168, %v166
  %v211 = vpack.c.b16 %v171, %v169
  %v212 = vpack.c.b16 %v172, %v170
  %v213 = vpack.c.b16 %v175, %v173
  %v214 = vpack.c.b16 %v176, %v174
  %v215 = vpack.c.b16 %v179, %v177
  %v216 = vpack.c.b16 %v180, %v178
  %v217 = vpack.c.b16 %v183, %v181
  %v218 = vpack.c.b16 %v184, %v182
  %v219 = vpack.c.b16 %v187, %v185
  %v220 = vpack.c.b16 %v188, %v186
  %v285 = vunpack.c.l.b16 %v61
  %v286 = vunpack.c.l.b16 %v62
  %v287 = vunpack.c.l.b16 %v63
  %v288 = vunpack.c.l.b16 %v64
  %v289 = vunpack.c.l.b16 %v65
  %v290 = vunpack.c.l.b16 %v66
  %v291 = vunpack.c.l.b16 %v67
  %v292 = vunpack.c.l.b16 %v68
  %v293 = vunpack.c.l.b16 %v69
  %v294 = vunpack.c.l.b16 %v70
  %v295 = vunpack.c.l.b16 %v71
  %v296 = vunpack.c.l.b16 %v72
  %v297 = vunpack.c.l.b16 %v73
  %v298 = vunpack.c.l.b16 %v74
  %v299 = vunpack.c.l.b16 %v75
  %v300 = vunpack.c.l.b16 %v76
  %v301 = vunpack.c.l.b16 %v77
  %v302 = vunpack.c.l.b16 %v78
  %v303 = vunpack.c.l.b16 %v79
  %v304 = vunpack.c.l.b16 %v80
  %v305 = vunpack.c.l.b16 %v81
  %v306 = vunpack.c.l.b16 %v82
  %v307 = vunpack.c.l.b16 %v83
  %v308 = vunpack.c.l.b16 %v84
  %v309 = vunpack.c.l.b16 %v85
  %v310 = vunpack.c.l.b16 %v86
  %v311 = vunpack.c.l.b16 %v87
  %v312 = vunpack.c.l.b16 %v88
  %v313 = vunpack.c.l.b16 %v89
  %v314 = vunpack.c.l.b16 %v90
  %v315 = vunpack.c.l.b16 %v91
  %v316 = vunpack.c.l.b16 %v92
  %v317 = vpack.c.b16 %v286, %v285
  %v318 = vpack.c.b16 %v288, %v287
  %v319 = vpack.c.b16 %v290, %v289
  %v320 = vpack.c.b16 %v292, %v291
  %v321 = vpack.c.b16 %v294, %v293
  %v322 = vpack.c.b16 %v296, %v295
  %v323 = vpack.c.b16 %v298, %v297
  %v324 = vpack.c.b16 %v300, %v299
  %v325 = vpack.c.b16 %v302, %v301
  %v326 = vpack.c.b16 %v304, %v303
  %v327 = vpack.c.b16 %v306, %v305
  %v328 = vpack.c.b16 %v308, %v307
  %v329 = vpack.c.b16 %v310, %v309
  %v330 = vpack.c.b16 %v312, %v311
  %v331 = vpack.c.b16 %v314, %v313
  %v332 = vpack.c.b16 %v316, %v315
  %349 = vmatpush.bf16.msra.mxu0 %v324
  %350 = vmatpush.bf16.msra.mxu0 %v323
  %351 = vmatpush.bf16.msra.mxu0 %v322
  %352 = vmatpush.bf16.msra.mxu0 %v321
  %353 = vmatpush.bf16.msra.mxu0 %v320
  %354 = vmatpush.bf16.msra.mxu0 %v319
  %355 = vmatpush.bf16.msra.mxu0 %v318
  %356 = vmatpush.bf16.msra.mxu0 %v317
  %357 = vmatmul.bf16.gmra.mxu0 %v189
  %v358 = vpop.f32.mrf.mxu0
  %v359 = vadd.f32 0.0, %v358
  %v360 = vpop.f32.mrf.mxu0
  %v361 = vadd.f32 0.0, %v360
  %362 = vmatmul.bf16.gmra.mxu0 %v191
  %v363 = vpop.f32.mrf.mxu0
  %v364 = vadd.f32 0.0, %v363
  %v365 = vpop.f32.mrf.mxu0
  %v366 = vadd.f32 0.0, %v365
  %367 = vmatmul.bf16.gmra.mxu0 %v193
  %v368 = vpop.f32.mrf.mxu0
  %v369 = vadd.f32 0.0, %v368
  %v370 = vpop.f32.mrf.mxu0
  %v371 = vadd.f32 0.0, %v370
  %372 = vmatmul.bf16.gmra.mxu0 %v195
  %v373 = vpop.f32.mrf.mxu0
  %v374 = vadd.f32 0.0, %v373
  %v375 = vpop.f32.mrf.mxu0
  %v376 = vadd.f32 0.0, %v375
  %377 = vmatmul.bf16.gmra.mxu0 %v197
  %v378 = vpop.f32.mrf.mxu0
  %v379 = vadd.f32 0.0, %v378
  %v380 = vpop.f32.mrf.mxu0
  %v381 = vadd.f32 0.0, %v380
  %382 = vmatmul.bf16.gmra.mxu0 %v199
  %v383 = vpop.f32.mrf.mxu0
  %v384 = vadd.f32 0.0, %v383
  %v385 = vpop.f32.mrf.mxu0
  %v386 = vadd.f32 0.0, %v385
  %387 = vmatmul.bf16.gmra.mxu0 %v201
  %v388 = vpop.f32.mrf.mxu0
  %v389 = vadd.f32 0.0, %v388
  %v390 = vpop.f32.mrf.mxu0
  %v391 = vadd.f32 0.0, %v390
  %392 = vmatmul.bf16.gmra.mxu0 %v203
  %v393 = vpop.f32.mrf.mxu0
  %v394 = vadd.f32 0.0, %v393
  %v395 = vpop.f32.mrf.mxu0
  %v396 = vadd.f32 0.0, %v395
  %397 = vmatmul.bf16.gmra.mxu0 %v205
  %v398 = vpop.f32.mrf.mxu0
  %v399 = vadd.f32 0.0, %v398
  %v400 = vpop.f32.mrf.mxu0
  %v401 = vadd.f32 0.0, %v400
  %402 = vmatmul.bf16.gmra.mxu0 %v207
  %v403 = vpop.f32.mrf.mxu0
  %v404 = vadd.f32 0.0, %v403
  %v405 = vpop.f32.mrf.mxu0
  %v406 = vadd.f32 0.0, %v405
  %407 = vmatmul.bf16.gmra.mxu0 %v209
  %v408 = vpop.f32.mrf.mxu0
  %v409 = vadd.f32 0.0, %v408
  %v410 = vpop.f32.mrf.mxu0
  %v411 = vadd.f32 0.0, %v410
  %412 = vmatmul.bf16.gmra.mxu0 %v211
  %v413 = vpop.f32.mrf.mxu0
  %v414 = vadd.f32 0.0, %v413
  %v415 = vpop.f32.mrf.mxu0
  %v416 = vadd.f32 0.0, %v415
  %417 = vmatmul.bf16.gmra.mxu0 %v213
  %v418 = vpop.f32.mrf.mxu0
  %v419 = vadd.f32 0.0, %v418
  %v420 = vpop.f32.mrf.mxu0
  %v421 = vadd.f32 0.0, %v420
  %422 = vmatmul.bf16.gmra.mxu0 %v215
  %v423 = vpop.f32.mrf.mxu0
  %v424 = vadd.f32 0.0, %v423
  %v425 = vpop.f32.mrf.mxu0
  %v426 = vadd.f32 0.0, %v425
  %427 = vmatmul.bf16.gmra.mxu0 %v217
  %v428 = vpop.f32.mrf.mxu0
  %v429 = vadd.f32 0.0, %v428
  %v430 = vpop.f32.mrf.mxu0
  %v431 = vadd.f32 0.0, %v430
  %432 = vmatmul.bf16.gmra.mxu0 %v219
  %v433 = vpop.f32.mrf.mxu0
  %v434 = vadd.f32 0.0, %v433
  %v435 = vpop.f32.mrf.mxu0
  %v436 = vadd.f32 0.0, %v435
  %437 = vdwg.mxu0
  %438 = vmatpush.bf16.msra.mxu0 %v332
  %439 = vmatpush.bf16.msra.mxu0 %v331
  %440 = vmatpush.bf16.msra.mxu0 %v330
  %441 = vmatpush.bf16.msra.mxu0 %v329
  %442 = vmatpush.bf16.msra.mxu0 %v328
  %443 = vmatpush.bf16.msra.mxu0 %v327
  %444 = vmatpush.bf16.msra.mxu0 %v326
  %445 = vmatpush.bf16.msra.mxu0 %v325
  %446 = vmatmul.bf16.gmra.mxu0 %v190
  %v447 = vpop.f32.mrf.mxu0
  %v448 = vadd.f32 %v359, %v447
  %v449 = vpop.f32.mrf.mxu0
  %v450 = vadd.f32 %v361, %v449
  %451 = vmatmul.bf16.gmra.mxu0 %v192
  %v452 = vpop.f32.mrf.mxu0
  %v453 = vadd.f32 %v364, %v452
  %v454 = vpop.f32.mrf.mxu0
  %v455 = vadd.f32 %v366, %v454
  %456 = vmatmul.bf16.gmra.mxu0 %v194
  %v457 = vpop.f32.mrf.mxu0
  %v458 = vadd.f32 %v369, %v457
  %v459 = vpop.f32.mrf.mxu0
  %v460 = vadd.f32 %v371, %v459
  %461 = vmatmul.bf16.gmra.mxu0 %v196
  %v462 = vpop.f32.mrf.mxu0
  %v463 = vadd.f32 %v374, %v462
  %v464 = vpop.f32.mrf.mxu0
  %v465 = vadd.f32 %v376, %v464
  %466 = vmatmul.bf16.gmra.mxu0 %v198
  %v467 = vpop.f32.mrf.mxu0
  %v468 = vadd.f32 %v379, %v467
  %v469 = vpop.f32.mrf.mxu0
  %v470 = vadd.f32 %v381, %v469
  %471 = vmatmul.bf16.gmra.mxu0 %v200
  %v472 = vpop.f32.mrf.mxu0
  %v473 = vadd.f32 %v384, %v472
  %v474 = vpop.f32.mrf.mxu0
  %v475 = vadd.f32 %v386, %v474
  %476 = vmatmul.bf16.gmra.mxu0 %v202
  %v477 = vpop.f32.mrf.mxu0
  %v478 = vadd.f32 %v389, %v477
  %v479 = vpop.f32.mrf.mxu0
  %v480 = vadd.f32 %v391, %v479
  %481 = vmatmul.bf16.gmra.mxu0 %v204
  %v482 = vpop.f32.mrf.mxu0
  %v483 = vadd.f32 %v394, %v482
  %v484 = vpop.f32.mrf.mxu0
  %v485 = vadd.f32 %v396, %v484
  %486 = vmatmul.bf16.gmra.mxu0 %v206
  %v487 = vpop.f32.mrf.mxu0
  %v488 = vadd.f32 %v399, %v487
  %v489 = vpop.f32.mrf.mxu0
  %v490 = vadd.f32 %v401, %v489
  %491 = vmatmul.bf16.gmra.mxu0 %v208
  %v492 = vpop.f32.mrf.mxu0
  %v493 = vadd.f32 %v404, %v492
  %v494 = vpop.f32.mrf.mxu0
  %v495 = vadd.f32 %v406, %v494
  %496 = vmatmul.bf16.gmra.mxu0 %v210
  %v497 = vpop.f32.mrf.mxu0
  %v498 = vadd.f32 %v409, %v497
  %v499 = vpop.f32.mrf.mxu0
  %v500 = vadd.f32 %v411, %v499
  %501 = vmatmul.bf16.gmra.mxu0 %v212
  %v502 = vpop.f32.mrf.mxu0
  %v503 = vadd.f32 %v414, %v502
  %v504 = vpop.f32.mrf.mxu0
  %v505 = vadd.f32 %v416, %v504
  %506 = vmatmul.bf16.gmra.mxu0 %v214
  %v507 = vpop.f32.mrf.mxu0
  %v508 = vadd.f32 %v419, %v507
  %v509 = vpop.f32.mrf.mxu0
  %v510 = vadd.f32 %v421, %v509
  %511 = vmatmul.bf16.gmra.mxu0 %v216
  %v512 = vpop.f32.mrf.mxu0
  %v513 = vadd.f32 %v424, %v512
  %v514 = vpop.f32.mrf.mxu0
  %v515 = vadd.f32 %v426, %v514
  %516 = vmatmul.bf16.gmra.mxu0 %v218
  %v517 = vpop.f32.mrf.mxu0
  %v518 = vadd.f32 %v429, %v517
  %v519 = vpop.f32.mrf.mxu0
  %v520 = vadd.f32 %v431, %v519
  %521 = vmatmul.bf16.gmra.mxu0 %v220
  %v522 = vpop.f32.mrf.mxu0
  %v523 = vadd.f32 %v434, %v522
  %v524 = vpop.f32.mrf.mxu0
  %v525 = vadd.f32 %v436, %v524
  %526 = vdwg.mxu0
  %v527 = vld [vmem:[%s2] sm:$0xff]
  %v528 = vld [vmem:[%s2 + $0x8] sm:$0xff]
  %v529 = vld [vmem:[%s2 + $0x10] sm:$0xff]
  %v530 = vld [vmem:[%s2 + $0x18] sm:$0xff]
  %v531 = vld [vmem:[%s2 + $0x20] sm:$0xff]
  %v532 = vld [vmem:[%s2 + $0x28] sm:$0xff]
  %v533 = vld [vmem:[%s2 + $0x30] sm:$0xff]
  %v534 = vld [vmem:[%s2 + $0x38] sm:$0xff]
  %v535 = vld [vmem:[%s2 + $0x40] sm:$0xff]
  %v536 = vld [vmem:[%s2 + $0x48] sm:$0xff]
  %v537 = vld [vmem:[%s2 + $0x50] sm:$0xff]
  %v538 = vld [vmem:[%s2 + $0x58] sm:$0xff]
  %v539 = vld [vmem:[%s2 + $0x60] sm:$0xff]
  %v540 = vld [vmem:[%s2 + $0x68] sm:$0xff]
  %v541 = vld [vmem:[%s2 + $0x70] sm:$0xff]
  %v542 = vld [vmem:[%s2 + $0x78] sm:$0xff]
  %543 = vmatpush.msra.mxu0 %v542
  %544 = vmatpush.msra.mxu0 %v541
  %545 = vmatpush.msra.mxu0 %v540
  %546 = vmatpush.msra.mxu0 %v539
  %547 = vmatpush.msra.mxu0 %v538
  %548 = vmatpush.msra.mxu0 %v537
  %549 = vmatpush.msra.mxu0 %v536
  %550 = vmatpush.msra.mxu0 %v535
  %551 = vmatpush.msra.mxu0 %v534
  %552 = vmatpush.msra.mxu0 %v533
  %553 = vmatpush.msra.mxu0 %v532
  %554 = vmatpush.msra.mxu0 %v531
  %555 = vmatpush.msra.mxu0 %v530
  %556 = vmatpush.msra.mxu0 %v529
  %557 = vmatpush.msra.mxu0 %v528
  %558 = vmatpush.msra.mxu0 %v527
  %559 = vmatmul.f32.gmra.mxu0 %v448
  %v560 = vpop.f32.mrf.mxu0
  %v561 = vadd.f32 0.0, %v560
  %562 = vmatmul.f32.gmra.mxu0 %v450
  %v563 = vpop.f32.mrf.mxu0
  %v564 = vadd.f32 0.0, %v563
  %565 = vmatmul.f32.gmra.mxu0 %v453
  %v566 = vpop.f32.mrf.mxu0
  %v567 = vadd.f32 0.0, %v566
  %568 = vmatmul.f32.gmra.mxu0 %v455
  %v569 = vpop.f32.mrf.mxu0
  %v570 = vadd.f32 0.0, %v569
  %571 = vmatmul.f32.gmra.mxu0 %v458
  %v572 = vpop.f32.mrf.mxu0
  %v573 = vadd.f32 0.0, %v572
  %574 = vmatmul.f32.gmra.mxu0 %v460
  %v575 = vpop.f32.mrf.mxu0
  %v576 = vadd.f32 0.0, %v575
  %577 = vmatmul.f32.gmra.mxu0 %v463
  %v578 = vpop.f32.mrf.mxu0
  %v579 = vadd.f32 0.0, %v578
  %580 = vmatmul.f32.gmra.mxu0 %v465
  %v581 = vpop.f32.mrf.mxu0
  %v582 = vadd.f32 0.0, %v581
  %583 = vmatmul.f32.gmra.mxu0 %v468
  %v584 = vpop.f32.mrf.mxu0
  %v585 = vadd.f32 0.0, %v584
  %586 = vmatmul.f32.gmra.mxu0 %v470
  %v587 = vpop.f32.mrf.mxu0
  %v588 = vadd.f32 0.0, %v587
  %589 = vmatmul.f32.gmra.mxu0 %v473
  %v590 = vpop.f32.mrf.mxu0
  %v591 = vadd.f32 0.0, %v590
  %592 = vmatmul.f32.gmra.mxu0 %v475
  %v593 = vpop.f32.mrf.mxu0
  %v594 = vadd.f32 0.0, %v593
  %595 = vmatmul.f32.gmra.mxu0 %v478
  %v596 = vpop.f32.mrf.mxu0
  %v597 = vadd.f32 0.0, %v596
  %598 = vmatmul.f32.gmra.mxu0 %v480
  %v599 = vpop.f32.mrf.mxu0
  %v600 = vadd.f32 0.0, %v599
  %601 = vmatmul.f32.gmra.mxu0 %v483
  %v602 = vpop.f32.mrf.mxu0
  %v603 = vadd.f32 0.0, %v602
  %604 = vmatmul.f32.gmra.mxu0 %v485
  %v605 = vpop.f32.mrf.mxu0
  %v606 = vadd.f32 0.0, %v605
  %607 = vmatmul.f32.gmra.mxu0 %v488
  %v608 = vpop.f32.mrf.mxu0
  %v609 = vadd.f32 0.0, %v608
  %610 = vmatmul.f32.gmra.mxu0 %v490
  %v611 = vpop.f32.mrf.mxu0
  %v612 = vadd.f32 0.0, %v611
  %613 = vmatmul.f32.gmra.mxu0 %v493
  %v614 = vpop.f32.mrf.mxu0
  %v615 = vadd.f32 0.0, %v614
  %616 = vmatmul.f32.gmra.mxu0 %v495
  %v617 = vpop.f32.mrf.mxu0
  %v618 = vadd.f32 0.0, %v617
  %619 = vmatmul.f32.gmra.mxu0 %v498
  %v620 = vpop.f32.mrf.mxu0
  %v621 = vadd.f32 0.0, %v620
  %622 = vmatmul.f32.gmra.mxu0 %v500
  %v623 = vpop.f32.mrf.mxu0
  %v624 = vadd.f32 0.0, %v623
  %625 = vmatmul.f32.gmra.mxu0 %v503
  %v626 = vpop.f32.mrf.mxu0
  %v627 = vadd.f32 0.0, %v626
  %628 = vmatmul.f32.gmra.mxu0 %v505
  %v629 = vpop.f32.mrf.mxu0
  %v630 = vadd.f32 0.0, %v629
  %631 = vmatmul.f32.gmra.mxu0 %v508
  %v632 = vpop.f32.mrf.mxu0
  %v633 = vadd.f32 0.0, %v632
  %634 = vmatmul.f32.gmra.mxu0 %v510
  %v635 = vpop.f32.mrf.mxu0
  %v636 = vadd.f32 0.0, %v635
  %637 = vmatmul.f32.gmra.mxu0 %v513
  %v638 = vpop.f32.mrf.mxu0
  %v639 = vadd.f32 0.0, %v638
  %640 = vmatmul.f32.gmra.mxu0 %v515
  %v641 = vpop.f32.mrf.mxu0
  %v642 = vadd.f32 0.0, %v641
  %643 = vmatmul.f32.gmra.mxu0 %v518
  %v644 = vpop.f32.mrf.mxu0
  %v645 = vadd.f32 0.0, %v644
  %646 = vmatmul.f32.gmra.mxu0 %v520
  %v647 = vpop.f32.mrf.mxu0
  %v648 = vadd.f32 0.0, %v647
  %649 = vmatmul.f32.gmra.mxu0 %v523
  %v650 = vpop.f32.mrf.mxu0
  %v651 = vadd.f32 0.0, %v650
  %652 = vmatmul.f32.gmra.mxu0 %v525
  %v653 = vpop.f32.mrf.mxu0
  %v654 = vadd.f32 0.0, %v653
  %655 = vdwg.mxu0
  %v656 = vld [vmem:[%s3] sm:$0x1]
  %v658 = vperm.slane %v656, 0
  %v660 = vmul.f32 %v561, %v658
  %v661 = vmul.f32 %v564, %v658
  %v662 = vmul.f32 %v567, %v658
  %v663 = vmul.f32 %v570, %v658
  %v664 = vmul.f32 %v573, %v658
  %v665 = vmul.f32 %v576, %v658
  %v666 = vmul.f32 %v579, %v658
  %v667 = vmul.f32 %v582, %v658
  %v668 = vmul.f32 %v585, %v658
  %v669 = vmul.f32 %v588, %v658
  %v670 = vmul.f32 %v591, %v658
  %v671 = vmul.f32 %v594, %v658
  %v672 = vmul.f32 %v597, %v658
  %v673 = vmul.f32 %v600, %v658
  %v674 = vmul.f32 %v603, %v658
  %v675 = vmul.f32 %v606, %v658
  %v676 = vmul.f32 %v609, %v658
  %v677 = vmul.f32 %v612, %v658
  %v678 = vmul.f32 %v615, %v658
  %v679 = vmul.f32 %v618, %v658
  %v680 = vmul.f32 %v621, %v658
  %v681 = vmul.f32 %v624, %v658
  %v682 = vmul.f32 %v627, %v658
  %v683 = vmul.f32 %v630, %v658
  %v684 = vmul.f32 %v633, %v658
  %v685 = vmul.f32 %v636, %v658
  %v686 = vmul.f32 %v639, %v658
  %v687 = vmul.f32 %v642, %v658
  %v688 = vmul.f32 %v645, %v658
  %v689 = vmul.f32 %v648, %v658
  %v690 = vmul.f32 %v651, %v658
  %v691 = vmul.f32 %v654, %v658
  %v692 = vld [vmem:[%s4] sm:$0x1]
  %v694 = vperm.slane %v692, 0
  %v696 = vadd.f32 %v660, %v694
  %v697 = vadd.f32 %v661, %v694
  %v698 = vadd.f32 %v662, %v694
  %v699 = vadd.f32 %v663, %v694
  %v700 = vadd.f32 %v664, %v694
  %v701 = vadd.f32 %v665, %v694
  %v702 = vadd.f32 %v666, %v694
  %v703 = vadd.f32 %v667, %v694
  %v704 = vadd.f32 %v668, %v694
  %v705 = vadd.f32 %v669, %v694
  %v706 = vadd.f32 %v670, %v694
  %v707 = vadd.f32 %v671, %v694
  %v708 = vadd.f32 %v672, %v694
  %v709 = vadd.f32 %v673, %v694
  %v710 = vadd.f32 %v674, %v694
  %v711 = vadd.f32 %v675, %v694
  %v712 = vadd.f32 %v676, %v694
  %v713 = vadd.f32 %v677, %v694
  %v714 = vadd.f32 %v678, %v694
  %v715 = vadd.f32 %v679, %v694
  %v716 = vadd.f32 %v680, %v694
  %v717 = vadd.f32 %v681, %v694
  %v718 = vadd.f32 %v682, %v694
  %v719 = vadd.f32 %v683, %v694
  %v720 = vadd.f32 %v684, %v694
  %v721 = vadd.f32 %v685, %v694
  %v722 = vadd.f32 %v686, %v694
  %v723 = vadd.f32 %v687, %v694
  %v724 = vadd.f32 %v688, %v694
  %v725 = vadd.f32 %v689, %v694
  %v726 = vadd.f32 %v690, %v694
  %v727 = vadd.f32 %v691, %v694
  %v728 = vmax.f32 %v696, 0.0
  %v729 = vmax.f32 %v697, 0.0
  %v730 = vmax.f32 %v698, 0.0
  %v731 = vmax.f32 %v699, 0.0
  %v732 = vmax.f32 %v700, 0.0
  %v733 = vmax.f32 %v701, 0.0
  %v734 = vmax.f32 %v702, 0.0
  %v735 = vmax.f32 %v703, 0.0
  %v736 = vmax.f32 %v704, 0.0
  %v737 = vmax.f32 %v705, 0.0
  %v738 = vmax.f32 %v706, 0.0
  %v739 = vmax.f32 %v707, 0.0
  %v740 = vmax.f32 %v708, 0.0
  %v741 = vmax.f32 %v709, 0.0
  %v742 = vmax.f32 %v710, 0.0
  %v743 = vmax.f32 %v711, 0.0
  %v744 = vmax.f32 %v712, 0.0
  %v745 = vmax.f32 %v713, 0.0
  %v746 = vmax.f32 %v714, 0.0
  %v747 = vmax.f32 %v715, 0.0
  %v748 = vmax.f32 %v716, 0.0
  %v749 = vmax.f32 %v717, 0.0
  %v750 = vmax.f32 %v718, 0.0
  %v751 = vmax.f32 %v719, 0.0
  %v752 = vmax.f32 %v720, 0.0
  %v753 = vmax.f32 %v721, 0.0
  %v754 = vmax.f32 %v722, 0.0
  %v755 = vmax.f32 %v723, 0.0
  %v756 = vmax.f32 %v724, 0.0
  %v757 = vmax.f32 %v725, 0.0
  %v758 = vmax.f32 %v726, 0.0
  %v759 = vmax.f32 %v727, 0.0
  %v760 = vpack.c.bf16 %v729, %v728
  %v761 = vpack.c.bf16 %v731, %v730
  %v762 = vpack.c.bf16 %v733, %v732
  %v763 = vpack.c.bf16 %v735, %v734
  %v764 = vpack.c.bf16 %v737, %v736
  %v765 = vpack.c.bf16 %v739, %v738
  %v766 = vpack.c.bf16 %v741, %v740
  %v767 = vpack.c.bf16 %v743, %v742
  %v768 = vpack.c.bf16 %v745, %v744
  %v769 = vpack.c.bf16 %v747, %v746
  %v770 = vpack.c.bf16 %v749, %v748
  %v771 = vpack.c.bf16 %v751, %v750
  %v772 = vpack.c.bf16 %v753, %v752
  %v773 = vpack.c.bf16 %v755, %v754
  %v774 = vpack.c.bf16 %v757, %v756
  %v775 = vpack.c.bf16 %v759, %v758
  %776 = vmatpush.bf16.msra.mxu0 %v767
  %777 = vmatpush.bf16.msra.mxu0 %v766
  %778 = vmatpush.bf16.msra.mxu0 %v765
  %779 = vmatpush.bf16.msra.mxu0 %v764
  %780 = vmatpush.bf16.msra.mxu0 %v763
  %781 = vmatpush.bf16.msra.mxu0 %v762
  %782 = vmatpush.bf16.msra.mxu0 %v761
  %783 = vmatpush.bf16.msra.mxu0 %v760
  %784 = vmatmul.bf16.gmra.mxu0 %v189
  %v785 = vpop.f32.mrf.mxu0
  %v786 = vadd.f32 0.0, %v785
  %v787 = vpop.f32.mrf.mxu0
  %v788 = vadd.f32 0.0, %v787
  %789 = vmatmul.bf16.gmra.mxu0 %v191
  %v790 = vpop.f32.mrf.mxu0
  %v791 = vadd.f32 0.0, %v790
  %v792 = vpop.f32.mrf.mxu0
  %v793 = vadd.f32 0.0, %v792
  %794 = vmatmul.bf16.gmra.mxu0 %v193
  %v795 = vpop.f32.mrf.mxu0
  %v796 = vadd.f32 0.0, %v795
  %v797 = vpop.f32.mrf.mxu0
  %v798 = vadd.f32 0.0, %v797
  %799 = vmatmul.bf16.gmra.mxu0 %v195
  %v800 = vpop.f32.mrf.mxu0
  %v801 = vadd.f32 0.0, %v800
  %v802 = vpop.f32.mrf.mxu0
  %v803 = vadd.f32 0.0, %v802
  %804 = vmatmul.bf16.gmra.mxu0 %v197
  %v805 = vpop.f32.mrf.mxu0
  %v806 = vadd.f32 0.0, %v805
  %v807 = vpop.f32.mrf.mxu0
  %v808 = vadd.f32 0.0, %v807
  %809 = vmatmul.bf16.gmra.mxu0 %v199
  %v810 = vpop.f32.mrf.mxu0
  %v811 = vadd.f32 0.0, %v810
  %v812 = vpop.f32.mrf.mxu0
  %v813 = vadd.f32 0.0, %v812
  %814 = vmatmul.bf16.gmra.mxu0 %v201
  %v815 = vpop.f32.mrf.mxu0
  %v816 = vadd.f32 0.0, %v815
  %v817 = vpop.f32.mrf.mxu0
  %v818 = vadd.f32 0.0, %v817
  %819 = vmatmul.bf16.gmra.mxu0 %v203
  %v820 = vpop.f32.mrf.mxu0
  %v821 = vadd.f32 0.0, %v820
  %v822 = vpop.f32.mrf.mxu0
  %v823 = vadd.f32 0.0, %v822
  %824 = vmatmul.bf16.gmra.mxu0 %v205
  %v825 = vpop.f32.mrf.mxu0
  %v826 = vadd.f32 0.0, %v825
  %v827 = vpop.f32.mrf.mxu0
  %v828 = vadd.f32 0.0, %v827
  %829 = vmatmul.bf16.gmra.mxu0 %v207
  %v830 = vpop.f32.mrf.mxu0
  %v831 = vadd.f32 0.0, %v830
  %v832 = vpop.f32.mrf.mxu0
  %v833 = vadd.f32 0.0, %v832
  %834 = vmatmul.bf16.gmra.mxu0 %v209
  %v835 = vpop.f32.mrf.mxu0
  %v836 = vadd.f32 0.0, %v835
  %v837 = vpop.f32.mrf.mxu0
  %v838 = vadd.f32 0.0, %v837
  %839 = vmatmul.bf16.gmra.mxu0 %v211
  %v840 = vpop.f32.mrf.mxu0
  %v841 = vadd.f32 0.0, %v840
  %v842 = vpop.f32.mrf.mxu0
  %v843 = vadd.f32 0.0, %v842
  %844 = vmatmul.bf16.gmra.mxu0 %v213
  %v845 = vpop.f32.mrf.mxu0
  %v846 = vadd.f32 0.0, %v845
  %v847 = vpop.f32.mrf.mxu0
  %v848 = vadd.f32 0.0, %v847
  %849 = vmatmul.bf16.gmra.mxu0 %v215
  %v850 = vpop.f32.mrf.mxu0
  %v851 = vadd.f32 0.0, %v850
  %v852 = vpop.f32.mrf.mxu0
  %v853 = vadd.f32 0.0, %v852
  %854 = vmatmul.bf16.gmra.mxu0 %v217
  %v855 = vpop.f32.mrf.mxu0
  %v856 = vadd.f32 0.0, %v855
  %v857 = vpop.f32.mrf.mxu0
  %v858 = vadd.f32 0.0, %v857
  %859 = vmatmul.bf16.gmra.mxu0 %v219
  %v860 = vpop.f32.mrf.mxu0
  %v861 = vadd.f32 0.0, %v860
  %v862 = vpop.f32.mrf.mxu0
  %v863 = vadd.f32 0.0, %v862
  %864 = vdwg.mxu0
  %865 = vmatpush.bf16.msra.mxu0 %v775
  %866 = vmatpush.bf16.msra.mxu0 %v774
  %867 = vmatpush.bf16.msra.mxu0 %v773
  %868 = vmatpush.bf16.msra.mxu0 %v772
  %869 = vmatpush.bf16.msra.mxu0 %v771
  %870 = vmatpush.bf16.msra.mxu0 %v770
  %871 = vmatpush.bf16.msra.mxu0 %v769
  %872 = vmatpush.bf16.msra.mxu0 %v768
  %873 = vmatmul.bf16.gmra.mxu0 %v190
  %v874 = vpop.f32.mrf.mxu0
  %v875 = vadd.f32 %v786, %v874
  %v876 = vpop.f32.mrf.mxu0
  %v877 = vadd.f32 %v788, %v876
  %878 = vmatmul.bf16.gmra.mxu0 %v192
  %v879 = vpop.f32.mrf.mxu0
  %v880 = vadd.f32 %v791, %v879
  %v881 = vpop.f32.mrf.mxu0
  %v882 = vadd.f32 %v793, %v881
  %883 = vmatmul.bf16.gmra.mxu0 %v194
  %v884 = vpop.f32.mrf.mxu0
  %v885 = vadd.f32 %v796, %v884
  %v886 = vpop.f32.mrf.mxu0
  %v887 = vadd.f32 %v798, %v886
  %888 = vmatmul.bf16.gmra.mxu0 %v196
  %v889 = vpop.f32.mrf.mxu0
  %v890 = vadd.f32 %v801, %v889
  %v891 = vpop.f32.mrf.mxu0
  %v892 = vadd.f32 %v803, %v891
  %893 = vmatmul.bf16.gmra.mxu0 %v198
  %v894 = vpop.f32.mrf.mxu0
  %v895 = vadd.f32 %v806, %v894
  %v896 = vpop.f32.mrf.mxu0
  %v897 = vadd.f32 %v808, %v896
  %898 = vmatmul.bf16.gmra.mxu0 %v200
  %v899 = vpop.f32.mrf.mxu0
  %v900 = vadd.f32 %v811, %v899
  %v901 = vpop.f32.mrf.mxu0
  %v902 = vadd.f32 %v813, %v901
  %903 = vmatmul.bf16.gmra.mxu0 %v202
  %v904 = vpop.f32.mrf.mxu0
  %v905 = vadd.f32 %v816, %v904
  %v906 = vpop.f32.mrf.mxu0
  %v907 = vadd.f32 %v818, %v906
  %908 = vmatmul.bf16.gmra.mxu0 %v204
  %v909 = vpop.f32.mrf.mxu0
  %v910 = vadd.f32 %v821, %v909
  %v911 = vpop.f32.mrf.mxu0
  %v912 = vadd.f32 %v823, %v911
  %913 = vmatmul.bf16.gmra.mxu0 %v206
  %v914 = vpop.f32.mrf.mxu0
  %v915 = vadd.f32 %v826, %v914
  %v916 = vpop.f32.mrf.mxu0
  %v917 = vadd.f32 %v828, %v916
  %918 = vmatmul.bf16.gmra.mxu0 %v208
  %v919 = vpop.f32.mrf.mxu0
  %v920 = vadd.f32 %v831, %v919
  %v921 = vpop.f32.mrf.mxu0
  %v922 = vadd.f32 %v833, %v921
  %923 = vmatmul.bf16.gmra.mxu0 %v210
  %v924 = vpop.f32.mrf.mxu0
  %v925 = vadd.f32 %v836, %v924
  %v926 = vpop.f32.mrf.mxu0
  %v927 = vadd.f32 %v838, %v926
  %928 = vmatmul.bf16.gmra.mxu0 %v212
  %v929 = vpop.f32.mrf.mxu0
  %v930 = vadd.f32 %v841, %v929
  %v931 = vpop.f32.mrf.mxu0
  %v932 = vadd.f32 %v843, %v931
  %933 = vmatmul.bf16.gmra.mxu0 %v214
  %v934 = vpop.f32.mrf.mxu0
  %v935 = vadd.f32 %v846, %v934
  %v936 = vpop.f32.mrf.mxu0
  %v937 = vadd.f32 %v848, %v936
  %938 = vmatmul.bf16.gmra.mxu0 %v216
  %v939 = vpop.f32.mrf.mxu0
  %v940 = vadd.f32 %v851, %v939
  %v941 = vpop.f32.mrf.mxu0
  %v942 = vadd.f32 %v853, %v941
  %943 = vmatmul.bf16.gmra.mxu0 %v218
  %v944 = vpop.f32.mrf.mxu0
  %v945 = vadd.f32 %v856, %v944
  %v946 = vpop.f32.mrf.mxu0
  %v947 = vadd.f32 %v858, %v946
  %948 = vmatmul.bf16.gmra.mxu0 %v220
  %v949 = vpop.f32.mrf.mxu0
  %v950 = vadd.f32 %v861, %v949
  %v951 = vpop.f32.mrf.mxu0
  %v952 = vadd.f32 %v863, %v951
  %953 = vdwg.mxu0
  %s954 = scalar_lea.vmem %s2, 128
  %v955 = vld [vmem:[%s954] sm:$0xff]
  %v956 = vld [vmem:[%s954 + $0x8] sm:$0xff]
  %v957 = vld [vmem:[%s954 + $0x10] sm:$0xff]
  %v958 = vld [vmem:[%s954 + $0x18] sm:$0xff]
  %v959 = vld [vmem:[%s954 + $0x20] sm:$0xff]
  %v960 = vld [vmem:[%s954 + $0x28] sm:$0xff]
  %v961 = vld [vmem:[%s954 + $0x30] sm:$0xff]
  %v962 = vld [vmem:[%s954 + $0x38] sm:$0xff]
  %v963 = vld [vmem:[%s954 + $0x40] sm:$0xff]
  %v964 = vld [vmem:[%s954 + $0x48] sm:$0xff]
  %v965 = vld [vmem:[%s954 + $0x50] sm:$0xff]
  %v966 = vld [vmem:[%s954 + $0x58] sm:$0xff]
  %v967 = vld [vmem:[%s954 + $0x60] sm:$0xff]
  %v968 = vld [vmem:[%s954 + $0x68] sm:$0xff]
  %v969 = vld [vmem:[%s954 + $0x70] sm:$0xff]
  %v970 = vld [vmem:[%s954 + $0x78] sm:$0xff]
  %971 = vmatpush.msra.mxu0 %v970
  %972 = vmatpush.msra.mxu0 %v969
  %973 = vmatpush.msra.mxu0 %v968
  %974 = vmatpush.msra.mxu0 %v967
  %975 = vmatpush.msra.mxu0 %v966
  %976 = vmatpush.msra.mxu0 %v965
  %977 = vmatpush.msra.mxu0 %v964
  %978 = vmatpush.msra.mxu0 %v963
  %979 = vmatpush.msra.mxu0 %v962
  %980 = vmatpush.msra.mxu0 %v961
  %981 = vmatpush.msra.mxu0 %v960
  %982 = vmatpush.msra.mxu0 %v959
  %983 = vmatpush.msra.mxu0 %v958
  %984 = vmatpush.msra.mxu0 %v957
  %985 = vmatpush.msra.mxu0 %v956
  %986 = vmatpush.msra.mxu0 %v955
  %987 = vmatmul.f32.gmra.mxu0 %v875
  %v988 = vpop.f32.mrf.mxu0
  %v989 = vadd.f32 0.0, %v988
  %990 = vmatmul.f32.gmra.mxu0 %v877
  %v991 = vpop.f32.mrf.mxu0
  %v992 = vadd.f32 0.0, %v991
  %993 = vmatmul.f32.gmra.mxu0 %v880
  %v994 = vpop.f32.mrf.mxu0
  %v995 = vadd.f32 0.0, %v994
  %996 = vmatmul.f32.gmra.mxu0 %v882
  %v997 = vpop.f32.mrf.mxu0
  %v998 = vadd.f32 0.0, %v997
  %999 = vmatmul.f32.gmra.mxu0 %v885
  %v1000 = vpop.f32.mrf.mxu0
  %v1001 = vadd.f32 0.0, %v1000
  %1002 = vmatmul.f32.gmra.mxu0 %v887
  %v1003 = vpop.f32.mrf.mxu0
  %v1004 = vadd.f32 0.0, %v1003
  %1005 = vmatmul.f32.gmra.mxu0 %v890
  %v1006 = vpop.f32.mrf.mxu0
  %v1007 = vadd.f32 0.0, %v1006
  %1008 = vmatmul.f32.gmra.mxu0 %v892
  %v1009 = vpop.f32.mrf.mxu0
  %v1010 = vadd.f32 0.0, %v1009
  %1011 = vmatmul.f32.gmra.mxu0 %v895
  %v1012 = vpop.f32.mrf.mxu0
  %v1013 = vadd.f32 0.0, %v1012
  %1014 = vmatmul.f32.gmra.mxu0 %v897
  %v1015 = vpop.f32.mrf.mxu0
  %v1016 = vadd.f32 0.0, %v1015
  %1017 = vmatmul.f32.gmra.mxu0 %v900
  %v1018 = vpop.f32.mrf.mxu0
  %v1019 = vadd.f32 0.0, %v1018
  %1020 = vmatmul.f32.gmra.mxu0 %v902
  %v1021 = vpop.f32.mrf.mxu0
  %v1022 = vadd.f32 0.0, %v1021
  %1023 = vmatmul.f32.gmra.mxu0 %v905
  %v1024 = vpop.f32.mrf.mxu0
  %v1025 = vadd.f32 0.0, %v1024
  %1026 = vmatmul.f32.gmra.mxu0 %v907
  %v1027 = vpop.f32.mrf.mxu0
  %v1028 = vadd.f32 0.0, %v1027
  %1029 = vmatmul.f32.gmra.mxu0 %v910
  %v1030 = vpop.f32.mrf.mxu0
  %v1031 = vadd.f32 0.0, %v1030
  %1032 = vmatmul.f32.gmra.mxu0 %v912
  %v1033 = vpop.f32.mrf.mxu0
  %v1034 = vadd.f32 0.0, %v1033
  %1035 = vmatmul.f32.gmra.mxu0 %v915
  %v1036 = vpop.f32.mrf.mxu0
  %v1037 = vadd.f32 0.0, %v1036
  %1038 = vmatmul.f32.gmra.mxu0 %v917
  %v1039 = vpop.f32.mrf.mxu0
  %v1040 = vadd.f32 0.0, %v1039
  %1041 = vmatmul.f32.gmra.mxu0 %v920
  %v1042 = vpop.f32.mrf.mxu0
  %v1043 = vadd.f32 0.0, %v1042
  %1044 = vmatmul.f32.gmra.mxu0 %v922
  %v1045 = vpop.f32.mrf.mxu0
  %v1046 = vadd.f32 0.0, %v1045
  %1047 = vmatmul.f32.gmra.mxu0 %v925
  %v1048 = vpop.f32.mrf.mxu0
  %v1049 = vadd.f32 0.0, %v1048
  %1050 = vmatmul.f32.gmra.mxu0 %v927
  %v1051 = vpop.f32.mrf.mxu0
  %v1052 = vadd.f32 0.0, %v1051
  %1053 = vmatmul.f32.gmra.mxu0 %v930
  %v1054 = vpop.f32.mrf.mxu0
  %v1055 = vadd.f32 0.0, %v1054
  %1056 = vmatmul.f32.gmra.mxu0 %v932
  %v1057 = vpop.f32.mrf.mxu0
  %v1058 = vadd.f32 0.0, %v1057
  %1059 = vmatmul.f32.gmra.mxu0 %v935
  %v1060 = vpop.f32.mrf.mxu0
  %v1061 = vadd.f32 0.0, %v1060
  %1062 = vmatmul.f32.gmra.mxu0 %v937
  %v1063 = vpop.f32.mrf.mxu0
  %v1064 = vadd.f32 0.0, %v1063
  %1065 = vmatmul.f32.gmra.mxu0 %v940
  %v1066 = vpop.f32.mrf.mxu0
  %v1067 = vadd.f32 0.0, %v1066
  %1068 = vmatmul.f32.gmra.mxu0 %v942
  %v1069 = vpop.f32.mrf.mxu0
  %v1070 = vadd.f32 0.0, %v1069
  %1071 = vmatmul.f32.gmra.mxu0 %v945
  %v1072 = vpop.f32.mrf.mxu0
  %v1073 = vadd.f32 0.0, %v1072
  %1074 = vmatmul.f32.gmra.mxu0 %v947
  %v1075 = vpop.f32.mrf.mxu0
  %v1076 = vadd.f32 0.0, %v1075
  %1077 = vmatmul.f32.gmra.mxu0 %v950
  %v1078 = vpop.f32.mrf.mxu0
  %v1079 = vadd.f32 0.0, %v1078
  %1080 = vmatmul.f32.gmra.mxu0 %v952
  %v1081 = vpop.f32.mrf.mxu0
  %v1082 = vadd.f32 0.0, %v1081
  %1083 = vdwg.mxu0
  %s1084 = scalar_lea.vmem %s3, 1
  %v1085 = vld [vmem:[%s1084] sm:$0x1]
  %v1087 = vperm.slane %v1085, 0
  %v1089 = vmul.f32 %v989, %v1087
  %v1090 = vmul.f32 %v992, %v1087
  %v1091 = vmul.f32 %v995, %v1087
  %v1092 = vmul.f32 %v998, %v1087
  %v1093 = vmul.f32 %v1001, %v1087
  %v1094 = vmul.f32 %v1004, %v1087
  %v1095 = vmul.f32 %v1007, %v1087
  %v1096 = vmul.f32 %v1010, %v1087
  %v1097 = vmul.f32 %v1013, %v1087
  %v1098 = vmul.f32 %v1016, %v1087
  %v1099 = vmul.f32 %v1019, %v1087
  %v1100 = vmul.f32 %v1022, %v1087
  %v1101 = vmul.f32 %v1025, %v1087
  %v1102 = vmul.f32 %v1028, %v1087
  %v1103 = vmul.f32 %v1031, %v1087
  %v1104 = vmul.f32 %v1034, %v1087
  %v1105 = vmul.f32 %v1037, %v1087
  %v1106 = vmul.f32 %v1040, %v1087
  %v1107 = vmul.f32 %v1043, %v1087
  %v1108 = vmul.f32 %v1046, %v1087
  %v1109 = vmul.f32 %v1049, %v1087
  %v1110 = vmul.f32 %v1052, %v1087
  %v1111 = vmul.f32 %v1055, %v1087
  %v1112 = vmul.f32 %v1058, %v1087
  %v1113 = vmul.f32 %v1061, %v1087
  %v1114 = vmul.f32 %v1064, %v1087
  %v1115 = vmul.f32 %v1067, %v1087
  %v1116 = vmul.f32 %v1070, %v1087
  %v1117 = vmul.f32 %v1073, %v1087
  %v1118 = vmul.f32 %v1076, %v1087
  %v1119 = vmul.f32 %v1079, %v1087
  %v1120 = vmul.f32 %v1082, %v1087
  %s1121 = scalar_lea.vmem %s4, 1
  %v1122 = vld [vmem:[%s1121] sm:$0x1]
  %v1124 = vperm.slane %v1122, 0
  %v1126 = vadd.f32 %v1089, %v1124
  %v1127 = vadd.f32 %v1090, %v1124
  %v1128 = vadd.f32 %v1091, %v1124
  %v1129 = vadd.f32 %v1092, %v1124
  %v1130 = vadd.f32 %v1093, %v1124
  %v1131 = vadd.f32 %v1094, %v1124
  %v1132 = vadd.f32 %v1095, %v1124
  %v1133 = vadd.f32 %v1096, %v1124
  %v1134 = vadd.f32 %v1097, %v1124
  %v1135 = vadd.f32 %v1098, %v1124
  %v1136 = vadd.f32 %v1099, %v1124
  %v1137 = vadd.f32 %v1100, %v1124
  %v1138 = vadd.f32 %v1101, %v1124
  %v1139 = vadd.f32 %v1102, %v1124
  %v1140 = vadd.f32 %v1103, %v1124
  %v1141 = vadd.f32 %v1104, %v1124
  %v1142 = vadd.f32 %v1105, %v1124
  %v1143 = vadd.f32 %v1106, %v1124
  %v1144 = vadd.f32 %v1107, %v1124
  %v1145 = vadd.f32 %v1108, %v1124
  %v1146 = vadd.f32 %v1109, %v1124
  %v1147 = vadd.f32 %v1110, %v1124
  %v1148 = vadd.f32 %v1111, %v1124
  %v1149 = vadd.f32 %v1112, %v1124
  %v1150 = vadd.f32 %v1113, %v1124
  %v1151 = vadd.f32 %v1114, %v1124
  %v1152 = vadd.f32 %v1115, %v1124
  %v1153 = vadd.f32 %v1116, %v1124
  %v1154 = vadd.f32 %v1117, %v1124
  %v1155 = vadd.f32 %v1118, %v1124
  %v1156 = vadd.f32 %v1119, %v1124
  %v1157 = vadd.f32 %v1120, %v1124
  %v1158 = vmax.f32 %v1126, 0.0
  %v1159 = vmax.f32 %v1127, 0.0
  %v1160 = vmax.f32 %v1128, 0.0
  %v1161 = vmax.f32 %v1129, 0.0
  %v1162 = vmax.f32 %v1130, 0.0
  %v1163 = vmax.f32 %v1131, 0.0
  %v1164 = vmax.f32 %v1132, 0.0
  %v1165 = vmax.f32 %v1133, 0.0
  %v1166 = vmax.f32 %v1134, 0.0
  %v1167 = vmax.f32 %v1135, 0.0
  %v1168 = vmax.f32 %v1136, 0.0
  %v1169 = vmax.f32 %v1137, 0.0
  %v1170 = vmax.f32 %v1138, 0.0
  %v1171 = vmax.f32 %v1139, 0.0
  %v1172 = vmax.f32 %v1140, 0.0
  %v1173 = vmax.f32 %v1141, 0.0
  %v1174 = vmax.f32 %v1142, 0.0
  %v1175 = vmax.f32 %v1143, 0.0
  %v1176 = vmax.f32 %v1144, 0.0
  %v1177 = vmax.f32 %v1145, 0.0
  %v1178 = vmax.f32 %v1146, 0.0
  %v1179 = vmax.f32 %v1147, 0.0
  %v1180 = vmax.f32 %v1148, 0.0
  %v1181 = vmax.f32 %v1149, 0.0
  %v1182 = vmax.f32 %v1150, 0.0
  %v1183 = vmax.f32 %v1151, 0.0
  %v1184 = vmax.f32 %v1152, 0.0
  %v1185 = vmax.f32 %v1153, 0.0
  %v1186 = vmax.f32 %v1154, 0.0
  %v1187 = vmax.f32 %v1155, 0.0
  %v1188 = vmax.f32 %v1156, 0.0
  %v1189 = vmax.f32 %v1157, 0.0
  %v1190 = vpack.c.bf16 %v1159, %v1158
  %v1191 = vpack.c.bf16 %v1161, %v1160
  %v1192 = vpack.c.bf16 %v1163, %v1162
  %v1193 = vpack.c.bf16 %v1165, %v1164
  %v1194 = vpack.c.bf16 %v1167, %v1166
  %v1195 = vpack.c.bf16 %v1169, %v1168
  %v1196 = vpack.c.bf16 %v1171, %v1170
  %v1197 = vpack.c.bf16 %v1173, %v1172
  %v1198 = vpack.c.bf16 %v1175, %v1174
  %v1199 = vpack.c.bf16 %v1177, %v1176
  %v1200 = vpack.c.bf16 %v1179, %v1178
  %v1201 = vpack.c.bf16 %v1181, %v1180
  %v1202 = vpack.c.bf16 %v1183, %v1182
  %v1203 = vpack.c.bf16 %v1185, %v1184
  %v1204 = vpack.c.bf16 %v1187, %v1186
  %v1205 = vpack.c.bf16 %v1189, %v1188
  %1206 = vmatpush.bf16.msra.mxu0 %v1197
  %1207 = vmatpush.bf16.msra.mxu0 %v1196
  %1208 = vmatpush.bf16.msra.mxu0 %v1195
  %1209 = vmatpush.bf16.msra.mxu0 %v1194
  %1210 = vmatpush.bf16.msra.mxu0 %v1193
  %1211 = vmatpush.bf16.msra.mxu0 %v1192
  %1212 = vmatpush.bf16.msra.mxu0 %v1191
  %1213 = vmatpush.bf16.msra.mxu0 %v1190
  %1214 = vmatmul.bf16.gmra.mxu0 %v189
  %v1215 = vpop.f32.mrf.mxu0
  %v1216 = vadd.f32 0.0, %v1215
  %v1217 = vpop.f32.mrf.mxu0
  %v1218 = vadd.f32 0.0, %v1217
  %1219 = vmatmul.bf16.gmra.mxu0 %v191
  %v1220 = vpop.f32.mrf.mxu0
  %v1221 = vadd.f32 0.0, %v1220
  %v1222 = vpop.f32.mrf.mxu0
  %v1223 = vadd.f32 0.0, %v1222
  %1224 = vmatmul.bf16.gmra.mxu0 %v193
  %v1225 = vpop.f32.mrf.mxu0
  %v1226 = vadd.f32 0.0, %v1225
  %v1227 = vpop.f32.mrf.mxu0
  %v1228 = vadd.f32 0.0, %v1227
  %1229 = vmatmul.bf16.gmra.mxu0 %v195
  %v1230 = vpop.f32.mrf.mxu0
  %v1231 = vadd.f32 0.0, %v1230
  %v1232 = vpop.f32.mrf.mxu0
  %v1233 = vadd.f32 0.0, %v1232
  %1234 = vmatmul.bf16.gmra.mxu0 %v197
  %v1235 = vpop.f32.mrf.mxu0
  %v1236 = vadd.f32 0.0, %v1235
  %v1237 = vpop.f32.mrf.mxu0
  %v1238 = vadd.f32 0.0, %v1237
  %1239 = vmatmul.bf16.gmra.mxu0 %v199
  %v1240 = vpop.f32.mrf.mxu0
  %v1241 = vadd.f32 0.0, %v1240
  %v1242 = vpop.f32.mrf.mxu0
  %v1243 = vadd.f32 0.0, %v1242
  %1244 = vmatmul.bf16.gmra.mxu0 %v201
  %v1245 = vpop.f32.mrf.mxu0
  %v1246 = vadd.f32 0.0, %v1245
  %v1247 = vpop.f32.mrf.mxu0
  %v1248 = vadd.f32 0.0, %v1247
  %1249 = vmatmul.bf16.gmra.mxu0 %v203
  %v1250 = vpop.f32.mrf.mxu0
  %v1251 = vadd.f32 0.0, %v1250
  %v1252 = vpop.f32.mrf.mxu0
  %v1253 = vadd.f32 0.0, %v1252
  %1254 = vmatmul.bf16.gmra.mxu0 %v205
  %v1255 = vpop.f32.mrf.mxu0
  %v1256 = vadd.f32 0.0, %v1255
  %v1257 = vpop.f32.mrf.mxu0
  %v1258 = vadd.f32 0.0, %v1257
  %1259 = vmatmul.bf16.gmra.mxu0 %v207
  %v1260 = vpop.f32.mrf.mxu0
  %v1261 = vadd.f32 0.0, %v1260
  %v1262 = vpop.f32.mrf.mxu0
  %v1263 = vadd.f32 0.0, %v1262
  %1264 = vmatmul.bf16.gmra.mxu0 %v209
  %v1265 = vpop.f32.mrf.mxu0
  %v1266 = vadd.f32 0.0, %v1265
  %v1267 = vpop.f32.mrf.mxu0
  %v1268 = vadd.f32 0.0, %v1267
  %1269 = vmatmul.bf16.gmra.mxu0 %v211
  %v1270 = vpop.f32.mrf.mxu0
  %v1271 = vadd.f32 0.0, %v1270
  %v1272 = vpop.f32.mrf.mxu0
  %v1273 = vadd.f32 0.0, %v1272
  %1274 = vmatmul.bf16.gmra.mxu0 %v213
  %v1275 = vpop.f32.mrf.mxu0
  %v1276 = vadd.f32 0.0, %v1275
  %v1277 = vpop.f32.mrf.mxu0
  %v1278 = vadd.f32 0.0, %v1277
  %1279 = vmatmul.bf16.gmra.mxu0 %v215
  %v1280 = vpop.f32.mrf.mxu0
  %v1281 = vadd.f32 0.0, %v1280
  %v1282 = vpop.f32.mrf.mxu0
  %v1283 = vadd.f32 0.0, %v1282
  %1284 = vmatmul.bf16.gmra.mxu0 %v217
  %v1285 = vpop.f32.mrf.mxu0
  %v1286 = vadd.f32 0.0, %v1285
  %v1287 = vpop.f32.mrf.mxu0
  %v1288 = vadd.f32 0.0, %v1287
  %1289 = vmatmul.bf16.gmra.mxu0 %v219
  %v1290 = vpop.f32.mrf.mxu0
  %v1291 = vadd.f32 0.0, %v1290
  %v1292 = vpop.f32.mrf.mxu0
  %v1293 = vadd.f32 0.0, %v1292
  %1294 = vdwg.mxu0
  %1295 = vmatpush.bf16.msra.mxu0 %v1205
  %1296 = vmatpush.bf16.msra.mxu0 %v1204
  %1297 = vmatpush.bf16.msra.mxu0 %v1203
  %1298 = vmatpush.bf16.msra.mxu0 %v1202
  %1299 = vmatpush.bf16.msra.mxu0 %v1201
  %1300 = vmatpush.bf16.msra.mxu0 %v1200
  %1301 = vmatpush.bf16.msra.mxu0 %v1199
  %1302 = vmatpush.bf16.msra.mxu0 %v1198
  %1303 = vmatmul.bf16.gmra.mxu0 %v190
  %v1304 = vpop.f32.mrf.mxu0
  %v1305 = vadd.f32 %v1216, %v1304
  %v1306 = vpop.f32.mrf.mxu0
  %v1307 = vadd.f32 %v1218, %v1306
  %1308 = vmatmul.bf16.gmra.mxu0 %v192
  %v1309 = vpop.f32.mrf.mxu0
  %v1310 = vadd.f32 %v1221, %v1309
  %v1311 = vpop.f32.mrf.mxu0
  %v1312 = vadd.f32 %v1223, %v1311
  %1313 = vmatmul.bf16.gmra.mxu0 %v194
  %v1314 = vpop.f32.mrf.mxu0
  %v1315 = vadd.f32 %v1226, %v1314
  %v1316 = vpop.f32.mrf.mxu0
  %v1317 = vadd.f32 %v1228, %v1316
  %1318 = vmatmul.bf16.gmra.mxu0 %v196
  %v1319 = vpop.f32.mrf.mxu0
  %v1320 = vadd.f32 %v1231, %v1319
  %v1321 = vpop.f32.mrf.mxu0
  %v1322 = vadd.f32 %v1233, %v1321
  %1323 = vmatmul.bf16.gmra.mxu0 %v198
  %v1324 = vpop.f32.mrf.mxu0
  %v1325 = vadd.f32 %v1236, %v1324
  %v1326 = vpop.f32.mrf.mxu0
  %v1327 = vadd.f32 %v1238, %v1326
  %1328 = vmatmul.bf16.gmra.mxu0 %v200
  %v1329 = vpop.f32.mrf.mxu0
  %v1330 = vadd.f32 %v1241, %v1329
  %v1331 = vpop.f32.mrf.mxu0
  %v1332 = vadd.f32 %v1243, %v1331
  %1333 = vmatmul.bf16.gmra.mxu0 %v202
  %v1334 = vpop.f32.mrf.mxu0
  %v1335 = vadd.f32 %v1246, %v1334
  %v1336 = vpop.f32.mrf.mxu0
  %v1337 = vadd.f32 %v1248, %v1336
  %1338 = vmatmul.bf16.gmra.mxu0 %v204
  %v1339 = vpop.f32.mrf.mxu0
  %v1340 = vadd.f32 %v1251, %v1339
  %v1341 = vpop.f32.mrf.mxu0
  %v1342 = vadd.f32 %v1253, %v1341
  %1343 = vmatmul.bf16.gmra.mxu0 %v206
  %v1344 = vpop.f32.mrf.mxu0
  %v1345 = vadd.f32 %v1256, %v1344
  %v1346 = vpop.f32.mrf.mxu0
  %v1347 = vadd.f32 %v1258, %v1346
  %1348 = vmatmul.bf16.gmra.mxu0 %v208
  %v1349 = vpop.f32.mrf.mxu0
  %v1350 = vadd.f32 %v1261, %v1349
  %v1351 = vpop.f32.mrf.mxu0
  %v1352 = vadd.f32 %v1263, %v1351
  %1353 = vmatmul.bf16.gmra.mxu0 %v210
  %v1354 = vpop.f32.mrf.mxu0
  %v1355 = vadd.f32 %v1266, %v1354
  %v1356 = vpop.f32.mrf.mxu0
  %v1357 = vadd.f32 %v1268, %v1356
  %1358 = vmatmul.bf16.gmra.mxu0 %v212
  %v1359 = vpop.f32.mrf.mxu0
  %v1360 = vadd.f32 %v1271, %v1359
  %v1361 = vpop.f32.mrf.mxu0
  %v1362 = vadd.f32 %v1273, %v1361
  %1363 = vmatmul.bf16.gmra.mxu0 %v214
  %v1364 = vpop.f32.mrf.mxu0
  %v1365 = vadd.f32 %v1276, %v1364
  %v1366 = vpop.f32.mrf.mxu0
  %v1367 = vadd.f32 %v1278, %v1366
  %1368 = vmatmul.bf16.gmra.mxu0 %v216
  %v1369 = vpop.f32.mrf.mxu0
  %v1370 = vadd.f32 %v1281, %v1369
  %v1371 = vpop.f32.mrf.mxu0
  %v1372 = vadd.f32 %v1283, %v1371
  %1373 = vmatmul.bf16.gmra.mxu0 %v218
  %v1374 = vpop.f32.mrf.mxu0
  %v1375 = vadd.f32 %v1286, %v1374
  %v1376 = vpop.f32.mrf.mxu0
  %v1377 = vadd.f32 %v1288, %v1376
  %1378 = vmatmul.bf16.gmra.mxu0 %v220
  %v1379 = vpop.f32.mrf.mxu0
  %v1380 = vadd.f32 %v1291, %v1379
  %v1381 = vpop.f32.mrf.mxu0
  %v1382 = vadd.f32 %v1293, %v1381
  %1383 = vdwg.mxu0
  %s1384 = scalar_lea.vmem %s2, 256
  %v1385 = vld [vmem:[%s1384] sm:$0xff]
  %v1386 = vld [vmem:[%s1384 + $0x8] sm:$0xff]
  %v1387 = vld [vmem:[%s1384 + $0x10] sm:$0xff]
  %v1388 = vld [vmem:[%s1384 + $0x18] sm:$0xff]
  %v1389 = vld [vmem:[%s1384 + $0x20] sm:$0xff]
  %v1390 = vld [vmem:[%s1384 + $0x28] sm:$0xff]
  %v1391 = vld [vmem:[%s1384 + $0x30] sm:$0xff]
  %v1392 = vld [vmem:[%s1384 + $0x38] sm:$0xff]
  %v1393 = vld [vmem:[%s1384 + $0x40] sm:$0xff]
  %v1394 = vld [vmem:[%s1384 + $0x48] sm:$0xff]
  %v1395 = vld [vmem:[%s1384 + $0x50] sm:$0xff]
  %v1396 = vld [vmem:[%s1384 + $0x58] sm:$0xff]
  %v1397 = vld [vmem:[%s1384 + $0x60] sm:$0xff]
  %v1398 = vld [vmem:[%s1384 + $0x68] sm:$0xff]
  %v1399 = vld [vmem:[%s1384 + $0x70] sm:$0xff]
  %v1400 = vld [vmem:[%s1384 + $0x78] sm:$0xff]
  %1401 = vmatpush.msra.mxu0 %v1400
  %1402 = vmatpush.msra.mxu0 %v1399
  %1403 = vmatpush.msra.mxu0 %v1398
  %1404 = vmatpush.msra.mxu0 %v1397
  %1405 = vmatpush.msra.mxu0 %v1396
  %1406 = vmatpush.msra.mxu0 %v1395
  %1407 = vmatpush.msra.mxu0 %v1394
  %1408 = vmatpush.msra.mxu0 %v1393
  %1409 = vmatpush.msra.mxu0 %v1392
  %1410 = vmatpush.msra.mxu0 %v1391
  %1411 = vmatpush.msra.mxu0 %v1390
  %1412 = vmatpush.msra.mxu0 %v1389
  %1413 = vmatpush.msra.mxu0 %v1388
  %1414 = vmatpush.msra.mxu0 %v1387
  %1415 = vmatpush.msra.mxu0 %v1386
  %1416 = vmatpush.msra.mxu0 %v1385
  %1417 = vmatmul.f32.gmra.mxu0 %v1305
  %v1418 = vpop.f32.mrf.mxu0
  %v1419 = vadd.f32 0.0, %v1418
  %1420 = vmatmul.f32.gmra.mxu0 %v1307
  %v1421 = vpop.f32.mrf.mxu0
  %v1422 = vadd.f32 0.0, %v1421
  %1423 = vmatmul.f32.gmra.mxu0 %v1310
  %v1424 = vpop.f32.mrf.mxu0
  %v1425 = vadd.f32 0.0, %v1424
  %1426 = vmatmul.f32.gmra.mxu0 %v1312
  %v1427 = vpop.f32.mrf.mxu0
  %v1428 = vadd.f32 0.0, %v1427
  %1429 = vmatmul.f32.gmra.mxu0 %v1315
  %v1430 = vpop.f32.mrf.mxu0
  %v1431 = vadd.f32 0.0, %v1430
  %1432 = vmatmul.f32.gmra.mxu0 %v1317
  %v1433 = vpop.f32.mrf.mxu0
  %v1434 = vadd.f32 0.0, %v1433
  %1435 = vmatmul.f32.gmra.mxu0 %v1320
  %v1436 = vpop.f32.mrf.mxu0
  %v1437 = vadd.f32 0.0, %v1436
  %1438 = vmatmul.f32.gmra.mxu0 %v1322
  %v1439 = vpop.f32.mrf.mxu0
  %v1440 = vadd.f32 0.0, %v1439
  %1441 = vmatmul.f32.gmra.mxu0 %v1325
  %v1442 = vpop.f32.mrf.mxu0
  %v1443 = vadd.f32 0.0, %v1442
  %1444 = vmatmul.f32.gmra.mxu0 %v1327
  %v1445 = vpop.f32.mrf.mxu0
  %v1446 = vadd.f32 0.0, %v1445
  %1447 = vmatmul.f32.gmra.mxu0 %v1330
  %v1448 = vpop.f32.mrf.mxu0
  %v1449 = vadd.f32 0.0, %v1448
  %1450 = vmatmul.f32.gmra.mxu0 %v1332
  %v1451 = vpop.f32.mrf.mxu0
  %v1452 = vadd.f32 0.0, %v1451
  %1453 = vmatmul.f32.gmra.mxu0 %v1335
  %v1454 = vpop.f32.mrf.mxu0
  %v1455 = vadd.f32 0.0, %v1454
  %1456 = vmatmul.f32.gmra.mxu0 %v1337
  %v1457 = vpop.f32.mrf.mxu0
  %v1458 = vadd.f32 0.0, %v1457
  %1459 = vmatmul.f32.gmra.mxu0 %v1340
  %v1460 = vpop.f32.mrf.mxu0
  %v1461 = vadd.f32 0.0, %v1460
  %1462 = vmatmul.f32.gmra.mxu0 %v1342
  %v1463 = vpop.f32.mrf.mxu0
  %v1464 = vadd.f32 0.0, %v1463
  %1465 = vmatmul.f32.gmra.mxu0 %v1345
  %v1466 = vpop.f32.mrf.mxu0
  %v1467 = vadd.f32 0.0, %v1466
  %1468 = vmatmul.f32.gmra.mxu0 %v1347
  %v1469 = vpop.f32.mrf.mxu0
  %v1470 = vadd.f32 0.0, %v1469
  %1471 = vmatmul.f32.gmra.mxu0 %v1350
  %v1472 = vpop.f32.mrf.mxu0
  %v1473 = vadd.f32 0.0, %v1472
  %1474 = vmatmul.f32.gmra.mxu0 %v1352
  %v1475 = vpop.f32.mrf.mxu0
  %v1476 = vadd.f32 0.0, %v1475
  %1477 = vmatmul.f32.gmra.mxu0 %v1355
  %v1478 = vpop.f32.mrf.mxu0
  %v1479 = vadd.f32 0.0, %v1478
  %1480 = vmatmul.f32.gmra.mxu0 %v1357
  %v1481 = vpop.f32.mrf.mxu0
  %v1482 = vadd.f32 0.0, %v1481
  %1483 = vmatmul.f32.gmra.mxu0 %v1360
  %v1484 = vpop.f32.mrf.mxu0
  %v1485 = vadd.f32 0.0, %v1484
  %1486 = vmatmul.f32.gmra.mxu0 %v1362
  %v1487 = vpop.f32.mrf.mxu0
  %v1488 = vadd.f32 0.0, %v1487
  %1489 = vmatmul.f32.gmra.mxu0 %v1365
  %v1490 = vpop.f32.mrf.mxu0
  %v1491 = vadd.f32 0.0, %v1490
  %1492 = vmatmul.f32.gmra.mxu0 %v1367
  %v1493 = vpop.f32.mrf.mxu0
  %v1494 = vadd.f32 0.0, %v1493
  %1495 = vmatmul.f32.gmra.mxu0 %v1370
  %v1496 = vpop.f32.mrf.mxu0
  %v1497 = vadd.f32 0.0, %v1496
  %1498 = vmatmul.f32.gmra.mxu0 %v1372
  %v1499 = vpop.f32.mrf.mxu0
  %v1500 = vadd.f32 0.0, %v1499
  %1501 = vmatmul.f32.gmra.mxu0 %v1375
  %v1502 = vpop.f32.mrf.mxu0
  %v1503 = vadd.f32 0.0, %v1502
  %1504 = vmatmul.f32.gmra.mxu0 %v1377
  %v1505 = vpop.f32.mrf.mxu0
  %v1506 = vadd.f32 0.0, %v1505
  %1507 = vmatmul.f32.gmra.mxu0 %v1380
  %v1508 = vpop.f32.mrf.mxu0
  %v1509 = vadd.f32 0.0, %v1508
  %1510 = vmatmul.f32.gmra.mxu0 %v1382
  %v1511 = vpop.f32.mrf.mxu0
  %v1512 = vadd.f32 0.0, %v1511
  %1513 = vdwg.mxu0
  %s1514 = scalar_lea.vmem %s3, 2
  %v1515 = vld [vmem:[%s1514] sm:$0x1]
  %v1517 = vperm.slane %v1515, 0
  %v1519 = vmul.f32 %v1419, %v1517
  %v1520 = vmul.f32 %v1422, %v1517
  %v1521 = vmul.f32 %v1425, %v1517
  %v1522 = vmul.f32 %v1428, %v1517
  %v1523 = vmul.f32 %v1431, %v1517
  %v1524 = vmul.f32 %v1434, %v1517
  %v1525 = vmul.f32 %v1437, %v1517
  %v1526 = vmul.f32 %v1440, %v1517
  %v1527 = vmul.f32 %v1443, %v1517
  %v1528 = vmul.f32 %v1446, %v1517
  %v1529 = vmul.f32 %v1449, %v1517
  %v1530 = vmul.f32 %v1452, %v1517
  %v1531 = vmul.f32 %v1455, %v1517
  %v1532 = vmul.f32 %v1458, %v1517
  %v1533 = vmul.f32 %v1461, %v1517
  %v1534 = vmul.f32 %v1464, %v1517
  %v1535 = vmul.f32 %v1467, %v1517
  %v1536 = vmul.f32 %v1470, %v1517
  %v1537 = vmul.f32 %v1473, %v1517
  %v1538 = vmul.f32 %v1476, %v1517
  %v1539 = vmul.f32 %v1479, %v1517
  %v1540 = vmul.f32 %v1482, %v1517
  %v1541 = vmul.f32 %v1485, %v1517
  %v1542 = vmul.f32 %v1488, %v1517
  %v1543 = vmul.f32 %v1491, %v1517
  %v1544 = vmul.f32 %v1494, %v1517
  %v1545 = vmul.f32 %v1497, %v1517
  %v1546 = vmul.f32 %v1500, %v1517
  %v1547 = vmul.f32 %v1503, %v1517
  %v1548 = vmul.f32 %v1506, %v1517
  %v1549 = vmul.f32 %v1509, %v1517
  %v1550 = vmul.f32 %v1512, %v1517
  %s1551 = scalar_lea.vmem %s4, 2
  %v1552 = vld [vmem:[%s1551] sm:$0x1]
  %v1554 = vperm.slane %v1552, 0
  %v1556 = vadd.f32 %v1519, %v1554
  %v1557 = vadd.f32 %v1520, %v1554
  %v1558 = vadd.f32 %v1521, %v1554
  %v1559 = vadd.f32 %v1522, %v1554
  %v1560 = vadd.f32 %v1523, %v1554
  %v1561 = vadd.f32 %v1524, %v1554
  %v1562 = vadd.f32 %v1525, %v1554
  %v1563 = vadd.f32 %v1526, %v1554
  %v1564 = vadd.f32 %v1527, %v1554
  %v1565 = vadd.f32 %v1528, %v1554
  %v1566 = vadd.f32 %v1529, %v1554
  %v1567 = vadd.f32 %v1530, %v1554
  %v1568 = vadd.f32 %v1531, %v1554
  %v1569 = vadd.f32 %v1532, %v1554
  %v1570 = vadd.f32 %v1533, %v1554
  %v1571 = vadd.f32 %v1534, %v1554
  %v1572 = vadd.f32 %v1535, %v1554
  %v1573 = vadd.f32 %v1536, %v1554
  %v1574 = vadd.f32 %v1537, %v1554
  %v1575 = vadd.f32 %v1538, %v1554
  %v1576 = vadd.f32 %v1539, %v1554
  %v1577 = vadd.f32 %v1540, %v1554
  %v1578 = vadd.f32 %v1541, %v1554
  %v1579 = vadd.f32 %v1542, %v1554
  %v1580 = vadd.f32 %v1543, %v1554
  %v1581 = vadd.f32 %v1544, %v1554
  %v1582 = vadd.f32 %v1545, %v1554
  %v1583 = vadd.f32 %v1546, %v1554
  %v1584 = vadd.f32 %v1547, %v1554
  %v1585 = vadd.f32 %v1548, %v1554
  %v1586 = vadd.f32 %v1549, %v1554
  %v1587 = vadd.f32 %v1550, %v1554
  %v1588 = vmax.f32 %v1556, 0.0
  %v1589 = vmax.f32 %v1557, 0.0
  %v1590 = vmax.f32 %v1558, 0.0
  %v1591 = vmax.f32 %v1559, 0.0
  %v1592 = vmax.f32 %v1560, 0.0
  %v1593 = vmax.f32 %v1561, 0.0
  %v1594 = vmax.f32 %v1562, 0.0
  %v1595 = vmax.f32 %v1563, 0.0
  %v1596 = vmax.f32 %v1564, 0.0
  %v1597 = vmax.f32 %v1565, 0.0
  %v1598 = vmax.f32 %v1566, 0.0
  %v1599 = vmax.f32 %v1567, 0.0
  %v1600 = vmax.f32 %v1568, 0.0
  %v1601 = vmax.f32 %v1569, 0.0
  %v1602 = vmax.f32 %v1570, 0.0
  %v1603 = vmax.f32 %v1571, 0.0
  %v1604 = vmax.f32 %v1572, 0.0
  %v1605 = vmax.f32 %v1573, 0.0
  %v1606 = vmax.f32 %v1574, 0.0
  %v1607 = vmax.f32 %v1575, 0.0
  %v1608 = vmax.f32 %v1576, 0.0
  %v1609 = vmax.f32 %v1577, 0.0
  %v1610 = vmax.f32 %v1578, 0.0
  %v1611 = vmax.f32 %v1579, 0.0
  %v1612 = vmax.f32 %v1580, 0.0
  %v1613 = vmax.f32 %v1581, 0.0
  %v1614 = vmax.f32 %v1582, 0.0
  %v1615 = vmax.f32 %v1583, 0.0
  %v1616 = vmax.f32 %v1584, 0.0
  %v1617 = vmax.f32 %v1585, 0.0
  %v1618 = vmax.f32 %v1586, 0.0
  %v1619 = vmax.f32 %v1587, 0.0
  %v1620 = vpack.c.bf16 %v1589, %v1588
  %v1621 = vpack.c.bf16 %v1591, %v1590
  %v1622 = vpack.c.bf16 %v1593, %v1592
  %v1623 = vpack.c.bf16 %v1595, %v1594
  %v1624 = vpack.c.bf16 %v1597, %v1596
  %v1625 = vpack.c.bf16 %v1599, %v1598
  %v1626 = vpack.c.bf16 %v1601, %v1600
  %v1627 = vpack.c.bf16 %v1603, %v1602
  %v1628 = vpack.c.bf16 %v1605, %v1604
  %v1629 = vpack.c.bf16 %v1607, %v1606
  %v1630 = vpack.c.bf16 %v1609, %v1608
  %v1631 = vpack.c.bf16 %v1611, %v1610
  %v1632 = vpack.c.bf16 %v1613, %v1612
  %v1633 = vpack.c.bf16 %v1615, %v1614
  %v1634 = vpack.c.bf16 %v1617, %v1616
  %v1635 = vpack.c.bf16 %v1619, %v1618
  %v1636 = vld [vmem:[%s5] sm:$0xff]
  %v1638 = vunpack.c.l.b16 %v1636
  %v1639 = vunpack.c.h.b16 %v1636
  %v1640 = vpack.c.b16 %v1638, %v1638
  %v1641 = vpack.c.b16 %v1639, %v1639
  %1644 = vmatpush.bf16.msra.mxu0 %v1627
  %1645 = vmatpush.bf16.msra.mxu0 %v1626
  %1646 = vmatpush.bf16.msra.mxu0 %v1625
  %1647 = vmatpush.bf16.msra.mxu0 %v1624
  %1648 = vmatpush.bf16.msra.mxu0 %v1623
  %1649 = vmatpush.bf16.msra.mxu0 %v1622
  %1650 = vmatpush.bf16.msra.mxu0 %v1621
  %1651 = vmatpush.bf16.msra.mxu0 %v1620
  %1652 = vmatmul.bf16.gmra.mxu0 %v1640
  %v1653 = vpop.f32.mrf.mxu0
  %v1654 = vadd.f32 0.0, %v1653
  %v1655 = vpop.f32.mrf.mxu0
  %1656 = vdwg.mxu0
  %1657 = vmatpush.bf16.msra.mxu0 %v1635
  %1658 = vmatpush.bf16.msra.mxu0 %v1634
  %1659 = vmatpush.bf16.msra.mxu0 %v1633
  %1660 = vmatpush.bf16.msra.mxu0 %v1632
  %1661 = vmatpush.bf16.msra.mxu0 %v1631
  %1662 = vmatpush.bf16.msra.mxu0 %v1630
  %1663 = vmatpush.bf16.msra.mxu0 %v1629
  %1664 = vmatpush.bf16.msra.mxu0 %v1628
  %1665 = vmatmul.bf16.gmra.mxu0 %v1641
  %v1666 = vpop.f32.mrf.mxu0
  %v1667 = vadd.f32 %v1654, %v1666
  %v1668 = vpop.f32.mrf.mxu0
  %1669 = vdwg.mxu0
  %v1670 = vld [vmem:[%s6] sm:$0xff]
  %v1671 = vld [vmem:[%s6 + $0x8] sm:$0xff]
  %v1672 = vld [vmem:[%s6 + $0x10] sm:$0xff]
  %v1673 = vld [vmem:[%s6 + $0x18] sm:$0xff]
  %v1674 = vld [vmem:[%s6 + $0x20] sm:$0xff]
  %v1675 = vld [vmem:[%s6 + $0x28] sm:$0xff]
  %v1676 = vld [vmem:[%s6 + $0x30] sm:$0xff]
  %v1677 = vld [vmem:[%s6 + $0x38] sm:$0xff]
  %v1678 = vld [vmem:[%s6 + $0x40] sm:$0xff]
  %v1679 = vld [vmem:[%s6 + $0x48] sm:$0xff]
  %v1680 = vld [vmem:[%s6 + $0x50] sm:$0xff]
  %v1681 = vld [vmem:[%s6 + $0x58] sm:$0xff]
  %v1682 = vld [vmem:[%s6 + $0x60] sm:$0xff]
  %v1683 = vld [vmem:[%s6 + $0x68] sm:$0xff]
  %v1684 = vld [vmem:[%s6 + $0x70] sm:$0xff]
  %v1685 = vld [vmem:[%s6 + $0x78] sm:$0xff]
  %v1686 = vld [vmem:[%s7] sm:$0x1]
  %v1688 = vperm.slane %v1686, 0
  %1690 = vmatpush.msra.mxu0 %v1685
  %1691 = vmatpush.msra.mxu0 %v1684
  %1692 = vmatpush.msra.mxu0 %v1683
  %1693 = vmatpush.msra.mxu0 %v1682
  %1694 = vmatpush.msra.mxu0 %v1681
  %1695 = vmatpush.msra.mxu0 %v1680
  %1696 = vmatpush.msra.mxu0 %v1679
  %1697 = vmatpush.msra.mxu0 %v1678
  %1698 = vmatpush.msra.mxu0 %v1677
  %1699 = vmatpush.msra.mxu0 %v1676
  %1700 = vmatpush.msra.mxu0 %v1675
  %1701 = vmatpush.msra.mxu0 %v1674
  %1702 = vmatpush.msra.mxu0 %v1673
  %1703 = vmatpush.msra.mxu0 %v1672
  %1704 = vmatpush.msra.mxu0 %v1671
  %1705 = vmatpush.msra.mxu0 %v1670
  %1706 = vmatmul.f32.gmra.mxu0 %v1667
  %v1707 = vpop.f32.mrf.mxu0
  %v1708 = vadd.f32 %v1688, %v1707
  %1709 = vdwg.mxu0
  %1710 = vst [vmem:[%s8] sm:$0xff] %v1708
  // Predicated region
  $region34: #{gnn_forward.1} parent=0 // pred_check
    _
  $region35: #{gnn_forward.1} parent=0 // pred_check_branch
    %1712 = sbr.rel (0) target = $region37
  $region36: #{gnn_forward.1} parent=0 // pred_region
    _
  $region37: #{gnn_forward.1} parent=0 // pred_fallthru
    _
  // Predicated region
  $region38: #{gnn_forward.1} parent=0 // pred_check
    _
  $region39: #{gnn_forward.1} parent=0 // pred_check_branch
    %1714 = sbr.rel (0) target = $region41
  $region40: #{gnn_forward.1} parent=0 // pred_region
    _
  $region41: #{gnn_forward.1} parent=0 // pred_fallthru
    _

</llo_original>
